<compile_context>
chip_gen: v6e
topology: v6e:2x2x1
jax: 0.10.0
libtpu: 0.0.40
codegen_flags: <defaults>
</compile_context>

<pallas_src>
import functools

import numpy as np

import jax
import jax.numpy as jnp
from jax.experimental import pallas as pl
from jax.experimental.pallas import tpu as pltpu


_ROW_TILE_CAP = 512      # rows per grid step (multiple of 128 when batch allows)
_D_TILE_CAP = 2048       # input_dim tile for both kernels (multiple of 128)


def _round_up(x: int, m: int) -> int:
    return ((x + m - 1) // m) * m


@functools.lru_cache(maxsize=1)
def _vmem_limit_bytes() -> int:
    """Generation-aware scoped-VMEM limit (~3/4 of physical, 32..100 MiB)."""
    try:
        phys = int(pltpu.get_tpu_info().vmem_capacity_bytes)
    except Exception:
        phys = 64 * 1024 * 1024          # conservative (v7x-sized) fallback
    return max(32 * 1024 * 1024, min(phys * 3 // 4, 100 * 1024 * 1024))


def _bspec(shape, index_map, single_buffer=False):
    if single_buffer:  # constant block index across the grid -> 1 buffer only
        return pl.BlockSpec(shape, index_map, pipeline_mode=pl.Buffered(1))
    return pl.BlockSpec(shape, index_map)


# ----------------------------------------------------------------------------
# Kernels
# ----------------------------------------------------------------------------
def _encoder_kernel(feat_ref, wt_ref, enc_b_ref, enc_ref, acc_ref):
    """K-tiled  encoded = features @ W^T + encoder_bias.

    feat: (TN, TD) f32   wt: (TD, Lp) bf16   enc_b: (1, Lp) f32
    enc (out): (TN, Lp) bf16   acc (scratch): (TN, Lp) f32
    """
    k = pl.program_id(1)

    @pl.when(k == 0)
    def _():
        acc_ref[...] = jnp.zeros_like(acc_ref)

    acc_ref[...] += jnp.dot(feat_ref[...].astype(jnp.bfloat16), wt_ref[...],
                            preferred_element_type=jnp.float32)

    @pl.when(k == pl.num_programs(1) - 1)
    def _():
        enc_ref[...] = (acc_ref[...] + enc_b_ref[...]).astype(enc_ref.dtype)


def _decoder_kernel(enc_ref, w_ref, dec_b_ref, out_ref):
    """Output-D-tiled  reconstructed = encoded @ W + decoder_bias.

    enc: (TN, Lp) bf16   w: (Lp, TD) bf16   dec_b: (1, TD) f32   out: (TN, TD) f32
    """
    rec = jnp.dot(enc_ref[...], w_ref[...], preferred_element_type=jnp.float32)
    out_ref[...] = rec + dec_b_ref[...]


# ----------------------------------------------------------------------------
# Jitted forward: pad (if needed) -> encoder pallas_call -> decoder pallas_call
# ----------------------------------------------------------------------------
@jax.jit
def _tied_ae_forward(features, w_enc_t, w_dec, enc_b, dec_b):
    n, d = features.shape
    lp, dp = w_dec.shape

    feats = features.astype(jnp.float32)
    if d != dp:  # lane-align input_dim; zero-pad columns are numerically inert
        feats = jnp.pad(feats, ((0, 0), (0, dp - d)))

    tn = min(_round_up(n, 16), _ROW_TILE_CAP)
    td = min(dp, _D_TILE_CAP)
    ni = pl.cdiv(n, tn)          # ragged last row-block: OOB rows masked on write
    nk = dp // td
    vmem_limit = _vmem_limit_bytes()

    # ---- encoder: (n, Dp) @ (Dp, Lp) + b  ->  (n, Lp) bf16 ----
    encoded = pl.pallas_call(
        _encoder_kernel,
        out_shape=jax.ShapeDtypeStruct((n, lp), jnp.bfloat16),
        grid=(ni, nk),
        in_specs=[
            _bspec((tn, td), lambda i, k: (i, k)),
            _bspec((td, lp), lambda i, k: (k, 0), single_buffer=(nk == 1)),
            _bspec((1, lp), lambda i, k: (0, 0), single_buffer=True),
        ],
        out_specs=pl.BlockSpec((tn, lp), lambda i, k: (i, 0)),
        scratch_shapes=[pltpu.VMEM((tn, lp), jnp.float32)],
        compiler_params=pltpu.CompilerParams(
            dimension_semantics=("parallel", "arbitrary"),
            vmem_limit_bytes=vmem_limit),
    )(feats, w_enc_t, enc_b)

    # ---- decoder: (n, Lp) @ (Lp, Dp) + b  ->  (n, Dp) f32 ----
    out = pl.pallas_call(
        _decoder_kernel,
        out_shape=jax.ShapeDtypeStruct((n, dp), jnp.float32),
        grid=(ni, nk),
        in_specs=[
            _bspec((tn, lp), lambda i, j: (i, 0), single_buffer=(ni == 1)),
            _bspec((lp, td), lambda i, j: (0, j), single_buffer=(nk == 1)),
            _bspec((1, td), lambda i, j: (0, j), single_buffer=(nk == 1)),
        ],
        out_specs=pl.BlockSpec((tn, td), lambda i, j: (i, j)),
        compiler_params=pltpu.CompilerParams(
            dimension_semantics=("parallel", "parallel"),
            vmem_limit_bytes=vmem_limit),
    )(encoded, w_dec, dec_b)

    if dp != d:
        out = out[:, :d]
    return out


# ----------------------------------------------------------------------------
# TiedAE module (Pallas)
# ----------------------------------------------------------------------------
class TiedAEPallas:
    """Pallas port of anomalib's TiedAE: shared-weight encoder/decoder."""

    def __init__(self, key, input_dim: int, latent_dim: int,
                 weight=None, encoder_bias=None, decoder_bias=None):
        self.input_dim = input_dim
        self.latent_dim = latent_dim

        # Parameters exactly as in the PyTorch __init__ unless overridden:
        # xavier_uniform_ weight (latent_dim, input_dim), zero biases.
        if weight is None:
            bound = float(np.sqrt(6.0 / (latent_dim + input_dim)))
            weight = jax.random.uniform(
                key, (latent_dim, input_dim), jnp.float32, -bound, bound)
        self.weight = jnp.asarray(weight, jnp.float32)
        self.encoder_bias = (jnp.zeros((latent_dim,), jnp.float32)
                             if encoder_bias is None
                             else jnp.asarray(encoder_bias, jnp.float32))
        self.decoder_bias = (jnp.zeros((input_dim,), jnp.float32)
                             if decoder_bias is None
                             else jnp.asarray(decoder_bias, jnp.float32))

        # MXU-friendly zero-padded bf16 copies (zero rows/cols are inert; the
        # pad is sliced off in the wrapper).  W^T is materialized once so both
        # matmuls are canonical (M,K)x(K,N).
        dp = _round_up(input_dim, 128)
        lp = _round_up(latent_dim, 128)
        self._dp, self._lp = dp, lp
        w_pad = (jnp.zeros((lp, dp), jnp.float32)
                 .at[:latent_dim, :input_dim].set(self.weight))
        self._w_dec = w_pad.astype(jnp.bfloat16)        # (Lp, Dp) for decoder
        self._w_enc_t = w_pad.T.astype(jnp.bfloat16)    # (Dp, Lp) for encoder
        self._enc_b = (jnp.zeros((1, lp), jnp.float32)
                       .at[0, :latent_dim].set(self.encoder_bias))
        self._dec_b = (jnp.zeros((1, dp), jnp.float32)
                       .at[0, :input_dim].set(self.decoder_bias))

    def __call__(self, features):
        assert features.ndim == 2 and features.shape[1] == self.input_dim
        return _tied_ae_forward(features, self._w_enc_t, self._w_dec,
                                self._enc_b, self._dec_b)


# ----------------------------------------------------------------------------
# References for validation
# ----------------------------------------------------------------------------
def tied_ae_reference(features, weight, enc_bias, dec_bias):
    """Exact float64 reference of the PyTorch forward."""
    f = np.asarray(features, np.float64)
    w = np.asarray(weight, np.float64)
    enc = f @ w.T + np.asarray(enc_bias, np.float64)
    return enc @ w + np.asarray(dec_bias, np.float64)


def _as_bf16_f64(x):
    return np.asarray(
        jnp.asarray(np.asarray(x, np.float32)).astype(jnp.bfloat16)
        .astype(jnp.float32), np.float64)


def tied_ae_reference_bf16(features, weight, enc_bias, dec_bias):
    """Emulates the kernel's bf16-operand / f32-accumulation numerics."""
    f = _as_bf16_f64(features)
    w = _as_bf16_f64(weight)
    enc = f @ w.T + np.asarray(enc_bias, np.float64)
    enc = _as_bf16_f64(enc)
    return enc @ w + np.asarray(dec_bias, np.float64)


def _check(y, x, model, expected_shape):
    assert y.shape == expected_shape, (y.shape, expected_shape)
    y_np = np.asarray(y)
    assert np.all(np.isfinite(y_np)), "non-finite output"
    ref_bf = tied_ae_reference_bf16(x, model.weight, model.encoder_bias,
                                    model.decoder_bias)
    ref_64 = tied_ae_reference(x, model.weight, model.encoder_bias,
                               model.decoder_bias)
    assert np.allclose(y_np, ref_bf, rtol=2e-3, atol=2e-3), \
        f"bf16-emulated mismatch, max abs diff {np.max(np.abs(y_np - ref_bf))}"
    assert np.allclose(y_np, ref_64, rtol=3e-2, atol=3e-2), \
        f"f64 reference mismatch, max abs diff {np.max(np.abs(y_np - ref_64))}"


# ----------------------------------------------------------------------------
if __name__ == "__main__":
    key = jax.random.PRNGKey(0)
    k_w1, k_x1, k_w2, k_x2, k_b2e, k_b2d, k_w3, k_x3 = jax.random.split(key, 8)

    # Config 1: docstring example, fully lane-aligned dims (no padding path).
    m1 = TiedAEPallas(k_w1, input_dim=1024, latent_dim=128)
    x1 = jax.random.normal(k_x1, (32, 1024), jnp.float32)
    y1 = jax.block_until_ready(m1(x1))
    _check(y1, x1, m1, (32, 1024))

    # Config 2: unaligned dims (200 -> 256, 48 -> 128), ragged tiny batch,
    # nonzero biases — exercises padding, write masking and both bias adds.
    m2 = TiedAEPallas(
        k_w2, input_dim=200, latent_dim=48,
        encoder_bias=jax.random.normal(k_b2e, (48,), jnp.float32),
        decoder_bias=jax.random.normal(k_b2d, (200,), jnp.float32))
    x2 = jax.random.normal(k_x2, (5, 200), jnp.float32)
    y2 = jax.block_until_ready(m2(x2))
    _check(y2, x2, m2, (5, 200))

    # Config 3: exercises the D-tiling path (2 K-steps in the encoder,
    # 2 output-D tiles in the decoder) and multiple ragged row tiles.
    m3 = TiedAEPallas(k_w3, input_dim=4096, latent_dim=64)
    x3 = jax.random.normal(k_x3, (520, 4096), jnp.float32)
    y3 = jax.block_until_ready(m3(x3))
    _check(y3, x3, m3, (520, 4096))

    print("KERNEL_OK")
</pallas_src>

<mosaic_0001>
module attributes {stable_mosaic.version = 11 : i64} {
  func.func @_decoder_kernel(%arg0: i32, %arg1: i32, %arg2: memref<32x128xbf16, #tpu.memory_space<vmem>>, %arg3: memref<128x1024xbf16, #tpu.memory_space<vmem>>, %arg4: memref<1x1024xf32, #tpu.memory_space<vmem>>, %arg5: memref<32x1024xf32, #tpu.memory_space<vmem>>) attributes {dimension_semantics = [#tpu.dimension_semantics<parallel>, #tpu.dimension_semantics<parallel>], iteration_bounds = array<i64: 1, 1>, scalar_prefetch = 0 : i64, scratch_operands = 0 : i64, tpu.core_type = #tpu.core_type<tc>, window_params = [{pipeline_mode = #tpu.pipeline_mode<synchronous>, transform_indices = @transform_0, window_bounds = array<i64: 32, 128>}, {pipeline_mode = #tpu.pipeline_mode<synchronous>, transform_indices = @transform_1, window_bounds = array<i64: 128, 1024>}, {pipeline_mode = #tpu.pipeline_mode<synchronous>, transform_indices = @transform_2, window_bounds = array<i64: 1, 1024>}, {transform_indices = @transform_3, window_bounds = array<i64: 32, 1024>}]} {
    %c0 = arith.constant 0 : index
    %c0_0 = arith.constant 0 : index
    %0 = vector.load %arg2[%c0, %c0_0] : memref<32x128xbf16, #tpu.memory_space<vmem>>, vector<32x128xbf16>
    %c0_1 = arith.constant 0 : index
    %c0_2 = arith.constant 0 : index
    %1 = vector.load %arg3[%c0_1, %c0_2] : memref<128x1024xbf16, #tpu.memory_space<vmem>>, vector<128x1024xbf16>
    %cst = arith.constant dense<0.000000e+00> : vector<32x1024xf32>
    %2 = tpu.matmul %0, %1, %cst {dimension_numbers = #tpu.dot_dimension_numbers<[1], [0], [0], [1], [0, 0, 1, 1], [], []>} : vector<32x128xbf16>, vector<128x1024xbf16>, vector<32x1024xf32> -> vector<32x1024xf32>
    %c0_3 = arith.constant 0 : index
    %c0_4 = arith.constant 0 : index
    %3 = vector.load %arg4[%c0_3, %c0_4] : memref<1x1024xf32, #tpu.memory_space<vmem>>, vector<1x1024xf32>
    %4 = vector.broadcast %3 : vector<1x1024xf32> to vector<32x1024xf32>
    %5 = arith.addf %2, %4 : vector<32x1024xf32>
    %c0_5 = arith.constant 0 : index
    %c0_6 = arith.constant 0 : index
    %6 = vector.load %arg5[%c0_5, %c0_6] : memref<32x1024xf32, #tpu.memory_space<vmem>>, vector<32x1024xf32>
    tpu.vector_store %arg5[%c0_5, %c0_6], %5 {strides = array<i32>} : memref<32x1024xf32, #tpu.memory_space<vmem>>, vector<32x1024xf32>,
    return
  }
  func.func @transform_0(%arg0: i32, %arg1: i32) -> (i32, i32) {
    %c0_i32 = arith.constant 0 : i32
    %c0_i32_0 = arith.constant 0 : i32
    return %arg0, %c0_i32 : i32, i32
  }
  func.func @transform_1(%arg0: i32, %arg1: i32) -> (i32, i32) {
    %c0_i32 = arith.constant 0 : i32
    %c0_i32_0 = arith.constant 0 : i32
    return %c0_i32, %arg1 : i32, i32
  }
  func.func @transform_2(%arg0: i32, %arg1: i32) -> (i32, i32) {
    %c0_i32 = arith.constant 0 : i32
    %c0_i32_0 = arith.constant 0 : i32
    return %c0_i32, %arg1 : i32, i32
  }
  func.func @transform_3(%arg0: i32, %arg1: i32) -> (i32, i32) {
    %c0_i32 = arith.constant 0 : i32
    return %arg0, %arg1 : i32, i32
  }
}

module attributes {stable_mosaic.version = 11 : i64} {
  func.func @_encoder_kernel(%arg0: i32, %arg1: i32, %arg2: memref<32x1024xf32, #tpu.memory_space<vmem>>, %arg3: memref<1024x128xbf16, #tpu.memory_space<vmem>>, %arg4: memref<1x128xf32, #tpu.memory_space<vmem>>, %arg5: memref<32x128xbf16, #tpu.memory_space<vmem>>, %arg6: memref<32x128xf32, #tpu.memory_space<vmem>>) attributes {dimension_semantics = [#tpu.dimension_semantics<parallel>, #tpu.dimension_semantics<arbitrary>], iteration_bounds = array<i64: 1, 1>, scalar_prefetch = 0 : i64, scratch_operands = 1 : i64, tpu.core_type = #tpu.core_type<tc>, window_params = [{transform_indices = @transform_0, window_bounds = array<i64: 32, 1024>}, {pipeline_mode = #tpu.pipeline_mode<synchronous>, transform_indices = @transform_1, window_bounds = array<i64: 1024, 128>}, {pipeline_mode = #tpu.pipeline_mode<synchronous>, transform_indices = @transform_2, window_bounds = array<i64: 1, 128>}, {transform_indices = @transform_3, window_bounds = array<i64: 32, 128>}]} {
    %c0_i32 = arith.constant 0 : i32
    %0 = arith.cmpi eq, %arg1, %c0_i32 : i32
    %1 = arith.extui %0 : i1 to i32
    %c0_i32_0 = arith.constant 0 : i32
    %2 = arith.cmpi ne, %1, %c0_i32_0 : i32
    scf.if %2 {
      %cst_10 = arith.constant 0.000000e+00 : f32
      %13 = vector.broadcast %cst_10 : f32 to vector<32x128xf32>
      %c0_11 = arith.constant 0 : index
      %c0_12 = arith.constant 0 : index
      %14 = vector.load %arg6[%c0_11, %c0_12] : memref<32x128xf32, #tpu.memory_space<vmem>>, vector<32x128xf32>
      tpu.vector_store %arg6[%c0_11, %c0_12], %13 {strides = array<i32>} : memref<32x128xf32, #tpu.memory_space<vmem>>, vector<32x128xf32>,
    } else {
    }
    %c0 = arith.constant 0 : index
    %c0_1 = arith.constant 0 : index
    %3 = vector.load %arg6[%c0, %c0_1] : memref<32x128xf32, #tpu.memory_space<vmem>>, vector<32x128xf32>
    %c0_2 = arith.constant 0 : index
    %c0_3 = arith.constant 0 : index
    %4 = vector.load %arg2[%c0_2, %c0_3] : memref<32x1024xf32, #tpu.memory_space<vmem>>, vector<32x1024xf32>
    %5 = arith.truncf %4 : vector<32x1024xf32> to vector<32x1024xbf16>
    %c0_4 = arith.constant 0 : index
    %c0_5 = arith.constant 0 : index
    %6 = vector.load %arg3[%c0_4, %c0_5] : memref<1024x128xbf16, #tpu.memory_space<vmem>>, vector<1024x128xbf16>
    %cst = arith.constant dense<0.000000e+00> : vector<32x128xf32>
    %7 = tpu.matmul %5, %6, %cst {dimension_numbers = #tpu.dot_dimension_numbers<[1], [0], [0], [1], [0, 0, 1, 1], [], []>} : vector<32x1024xbf16>, vector<1024x128xbf16>, vector<32x128xf32> -> vector<32x128xf32>
    %8 = arith.addf %3, %7 : vector<32x128xf32>
    %c0_6 = arith.constant 0 : index
    %c0_7 = arith.constant 0 : index
    %9 = vector.load %arg6[%c0_6, %c0_7] : memref<32x128xf32, #tpu.memory_space<vmem>>, vector<32x128xf32>
    tpu.vector_store %arg6[%c0_6, %c0_7], %8 {strides = array<i32>} : memref<32x128xf32, #tpu.memory_space<vmem>>, vector<32x128xf32>,
    %c0_i32_8 = arith.constant 0 : i32
    %10 = arith.cmpi eq, %arg1, %c0_i32_8 : i32
    %11 = arith.extui %10 : i1 to i32
    %c0_i32_9 = arith.constant 0 : i32
    %12 = arith.cmpi ne, %11, %c0_i32_9 : i32
    scf.if %12 {
      %c0_10 = arith.constant 0 : index
      %c0_11 = arith.constant 0 : index
      %13 = vector.load %arg6[%c0_10, %c0_11] : memref<32x128xf32, #tpu.memory_space<vmem>>, vector<32x128xf32>
      %c0_12 = arith.constant 0 : index
      %c0_13 = arith.constant 0 : index
      %14 = vector.load %arg4[%c0_12, %c0_13] : memref<1x128xf32, #tpu.memory_space<vmem>>, vector<1x128xf32>
      %15 = vector.broadcast %14 : vector<1x128xf32> to vector<32x128xf32>
      %16 = arith.addf %13, %15 : vector<32x128xf32>
      %17 = arith.truncf %16 : vector<32x128xf32> to vector<32x128xbf16>
      %c0_14 = arith.constant 0 : index
      %c0_15 = arith.constant 0 : index
      %18 = vector.load %arg5[%c0_14, %c0_15] : memref<32x128xbf16, #tpu.memory_space<vmem>>, vector<32x128xbf16>
      tpu.vector_store %arg5[%c0_14, %c0_15], %17 {strides = array<i32>} : memref<32x128xbf16, #tpu.memory_space<vmem>>, vector<32x128xbf16>,
    } else {
    }
    return
  }
  func.func @transform_0(%arg0: i32, %arg1: i32) -> (i32, i32) {
    %c0_i32 = arith.constant 0 : i32
    return %arg0, %arg1 : i32, i32
  }
  func.func @transform_1(%arg0: i32, %arg1: i32) -> (i32, i32) {
    %c0_i32 = arith.constant 0 : i32
    %c0_i32_0 = arith.constant 0 : i32
    return %arg1, %c0_i32 : i32, i32
  }
  func.func @transform_2(%arg0: i32, %arg1: i32) -> (i32, i32) {
    %c0_i32 = arith.constant 0 : i32
    %c0_i32_0 = arith.constant 0 : i32
    %c0_i32_1 = arith.constant 0 : i32
    return %c0_i32, %c0_i32_0 : i32, i32
  }
  func.func @transform_3(%arg0: i32, %arg1: i32) -> (i32, i32) {
    %c0_i32 = arith.constant 0 : i32
    %c0_i32_0 = arith.constant 0 : i32
    return %arg0, %c0_i32 : i32, i32
  }
}

</mosaic_0001>

<llo_original>
// kernel: _tied_ae_forward.3
$region0: #{_tied_ae_forward.3}
  #allocation0 [shape = 'u32[]', space=smem, size = 0x4, offset = 0x4, fixed_abs, tag = 'smem constant byte address 0x4 - core index']
  #allocation1 [shape = 'u32[144,128]{1,0:T(1,128)}', space=vmem, size = 0x12000, scoped, tag = 'internal scratch']
  %s0 = inlined_call_operand.vmem [shape: bf16[32,128], index: 0, kind: input, shape index: {}]
  %s1 = inlined_call_operand.vmem [shape: bf16[128,1024], index: 1, kind: input, shape index: {}]
  %s2 = inlined_call_operand.vmem [shape: f32[1,1024], index: 2, kind: input, shape index: {}]
  %s3 = inlined_call_operand.hbm [shape: f32[32,1024], index: 3, kind: output, shape index: {}]
  %s4 = sld [smem:[#allocation0]]
  $region22: #{_tied_ae_forward.3} parent=0
    _
  %s6 = ssub.s32 1, %s4
  %s7 = scalar_select 0, %s6, %s4
  $region1: #{_tied_ae_forward.3} parent=0
    #allocation2 [shape = 'u8[131072]{0}', space=vmem, size = 0x20000, scoped, tag = 'output window, operand 0, single buffered']
    #allocation3 [shape = 's32[1]{0}', space=sflag, size = 0x4, scoped, tag = 'scoped memory for _tied_ae_forward.3']
    %8 = vsyncpa [#allocation3], 0
    // Predicated region
    $region2: #{_tied_ae_forward.3} parent=1 // pred_check
      _
    $region3: #{_tied_ae_forward.3} parent=1 // pred_check_branch
      %10 = sbr.rel (0) target = $region5
    $region4: #{_tied_ae_forward.3} parent=1 // pred_region
      _
    $region5: #{_tied_ae_forward.3} parent=1 // pred_fallthru
      _
    // Predicated region
    $region6: #{_tied_ae_forward.3} parent=1 // pred_check
      _
    $region7: #{_tied_ae_forward.3} parent=1 // pred_check_branch
      %12 = sbr.rel (0) target = $region9
    $region8: #{_tied_ae_forward.3} parent=1 // pred_region
      _
    $region9: #{_tied_ae_forward.3} parent=1 // pred_fallthru
      _
    // Predicated region
    $region10: #{_tied_ae_forward.3} parent=1 // pred_check
      _
    $region11: #{_tied_ae_forward.3} parent=1 // pred_check_branch
      %14 = sbr.rel (0) target = $region13
    $region12: #{_tied_ae_forward.3} parent=1 // pred_region
      _
    $region13: #{_tied_ae_forward.3} parent=1 // pred_fallthru
      _
    %v16 = vld [vmem:[%s0] sm:$0xf]
    %v17 = vld [vmem:[%s0 + $0x4] sm:$0xf]
    %v18 = vld [vmem:[%s0 + $0x8] sm:$0xf]
    %v19 = vld [vmem:[%s0 + $0xc] sm:$0xf]
    %v20 = vld [vmem:[%s1] sm:$0xff]
    %v21 = vld [vmem:[%s1 + $0x8] sm:$0xff]
    %v22 = vld [vmem:[%s1 + $0x10] sm:$0xff]
    %v23 = vld [vmem:[%s1 + $0x18] sm:$0xff]
    %v24 = vld [vmem:[%s1 + $0x20] sm:$0xff]
    %v25 = vld [vmem:[%s1 + $0x28] sm:$0xff]
    %v26 = vld [vmem:[%s1 + $0x30] sm:$0xff]
    %v27 = vld [vmem:[%s1 + $0x38] sm:$0xff]
    %v28 = vld [vmem:[%s1 + $0x40] sm:$0xff]
    %v29 = vld [vmem:[%s1 + $0x48] sm:$0xff]
    %v30 = vld [vmem:[%s1 + $0x50] sm:$0xff]
    %v31 = vld [vmem:[%s1 + $0x58] sm:$0xff]
    %v32 = vld [vmem:[%s1 + $0x60] sm:$0xff]
    %v33 = vld [vmem:[%s1 + $0x68] sm:$0xff]
    %v34 = vld [vmem:[%s1 + $0x70] sm:$0xff]
    %v35 = vld [vmem:[%s1 + $0x78] sm:$0xff]
    %v36 = vld [vmem:[%s1 + $0x80] sm:$0xff]
    %v37 = vld [vmem:[%s1 + $0x88] sm:$0xff]
    %v38 = vld [vmem:[%s1 + $0x90] sm:$0xff]
    %v39 = vld [vmem:[%s1 + $0x98] sm:$0xff]
    %v40 = vld [vmem:[%s1 + $0xa0] sm:$0xff]
    %v41 = vld [vmem:[%s1 + $0xa8] sm:$0xff]
    %v42 = vld [vmem:[%s1 + $0xb0] sm:$0xff]
    %v43 = vld [vmem:[%s1 + $0xb8] sm:$0xff]
    %v44 = vld [vmem:[%s1 + $0xc0] sm:$0xff]
    %v45 = vld [vmem:[%s1 + $0xc8] sm:$0xff]
    %v46 = vld [vmem:[%s1 + $0xd0] sm:$0xff]
    %v47 = vld [vmem:[%s1 + $0xd8] sm:$0xff]
    %v48 = vld [vmem:[%s1 + $0xe0] sm:$0xff]
    %v49 = vld [vmem:[%s1 + $0xe8] sm:$0xff]
    %v50 = vld [vmem:[%s1 + $0xf0] sm:$0xff]
    %v51 = vld [vmem:[%s1 + $0xf8] sm:$0xff]
    %v52 = vld [vmem:[%s1 + $0x100] sm:$0xff]
    %v53 = vld [vmem:[%s1 + $0x108] sm:$0xff]
    %v54 = vld [vmem:[%s1 + $0x110] sm:$0xff]
    %v55 = vld [vmem:[%s1 + $0x118] sm:$0xff]
    %v56 = vld [vmem:[%s1 + $0x120] sm:$0xff]
    %v57 = vld [vmem:[%s1 + $0x128] sm:$0xff]
    %v58 = vld [vmem:[%s1 + $0x130] sm:$0xff]
    %v59 = vld [vmem:[%s1 + $0x138] sm:$0xff]
    %v60 = vld [vmem:[%s1 + $0x140] sm:$0xff]
    %v61 = vld [vmem:[%s1 + $0x148] sm:$0xff]
    %v62 = vld [vmem:[%s1 + $0x150] sm:$0xff]
    %v63 = vld [vmem:[%s1 + $0x158] sm:$0xff]
    %v64 = vld [vmem:[%s1 + $0x160] sm:$0xff]
    %v65 = vld [vmem:[%s1 + $0x168] sm:$0xff]
    %v66 = vld [vmem:[%s1 + $0x170] sm:$0xff]
    %v67 = vld [vmem:[%s1 + $0x178] sm:$0xff]
    %v68 = vld [vmem:[%s1 + $0x180] sm:$0xff]
    %v69 = vld [vmem:[%s1 + $0x188] sm:$0xff]
    %v70 = vld [vmem:[%s1 + $0x190] sm:$0xff]
    %v71 = vld [vmem:[%s1 + $0x198] sm:$0xff]
    %v72 = vld [vmem:[%s1 + $0x1a0] sm:$0xff]
    %v73 = vld [vmem:[%s1 + $0x1a8] sm:$0xff]
    %v74 = vld [vmem:[%s1 + $0x1b0] sm:$0xff]
    %v75 = vld [vmem:[%s1 + $0x1b8] sm:$0xff]
    %v76 = vld [vmem:[%s1 + $0x1c0] sm:$0xff]
    %v77 = vld [vmem:[%s1 + $0x1c8] sm:$0xff]
    %v78 = vld [vmem:[%s1 + $0x1d0] sm:$0xff]
    %v79 = vld [vmem:[%s1 + $0x1d8] sm:$0xff]
    %v80 = vld [vmem:[%s1 + $0x1e0] sm:$0xff]
    %v81 = vld [vmem:[%s1 + $0x1e8] sm:$0xff]
    %v82 = vld [vmem:[%s1 + $0x1f0] sm:$0xff]
    %v83 = vld [vmem:[%s1 + $0x1f8] sm:$0xff]
    %v84 = vld [vmem:[%s2] sm:$0xff]
    %v86 = vlaneseq
    %v87 = vshrl.u32 %v86, 7
    %v88 = vsub.s32 0, %v87
    %v89 = vrot.slane %v84, %v88
    %v90 = vlaneseq
    %v91 = vshrl.u32 %v90, 7
    %v92 = vsub.s32 1, %v91
    %v93 = vrot.slane %v84, %v92
    %v94 = vlaneseq
    %v95 = vshrl.u32 %v94, 7
    %v96 = vsub.s32 2, %v95
    %v97 = vrot.slane %v84, %v96
    %v98 = vlaneseq
    %v99 = vshrl.u32 %v98, 7
    %v100 = vsub.s32 3, %v99
    %v101 = vrot.slane %v84, %v100
    %v102 = vlaneseq
    %v103 = vshrl.u32 %v102, 7
    %v104 = vsub.s32 4, %v103
    %v105 = vrot.slane %v84, %v104
    %v106 = vlaneseq
    %v107 = vshrl.u32 %v106, 7
    %v108 = vsub.s32 5, %v107
    %v109 = vrot.slane %v84, %v108
    %v110 = vlaneseq
    %v111 = vshrl.u32 %v110, 7
    %v112 = vsub.s32 6, %v111
    %v113 = vrot.slane %v84, %v112
    %v114 = vlaneseq
    %v115 = vshrl.u32 %v114, 7
    %v116 = vsub.s32 7, %v115
    %v117 = vrot.slane %v84, %v116
    %v130 = vunpack.c.l.b16 %v16
    %v131 = vunpack.c.l.b16 %v17
    %v132 = vunpack.c.l.b16 %v18
    %v133 = vunpack.c.l.b16 %v19
    %v134 = vpack.c.b16 %v131, %v130
    %v135 = vpack.c.b16 %v133, %v132
    %v202 = vunpack.c.l.b16 %v20
    %v203 = vunpack.c.h.b16 %v20
    %v204 = vunpack.c.l.b16 %v21
    %v205 = vunpack.c.h.b16 %v21
    %v206 = vunpack.c.l.b16 %v22
    %v207 = vunpack.c.h.b16 %v22
    %v208 = vunpack.c.l.b16 %v23
    %v209 = vunpack.c.h.b16 %v23
    %v210 = vunpack.c.l.b16 %v24
    %v211 = vunpack.c.h.b16 %v24
    %v212 = vunpack.c.l.b16 %v25
    %v213 = vunpack.c.h.b16 %v25
    %v214 = vunpack.c.l.b16 %v26
    %v215 = vunpack.c.h.b16 %v26
    %v216 = vunpack.c.l.b16 %v27
    %v217 = vunpack.c.h.b16 %v27
    %v218 = vunpack.c.l.b16 %v28
    %v219 = vunpack.c.h.b16 %v28
    %v220 = vunpack.c.l.b16 %v29
    %v221 = vunpack.c.h.b16 %v29
    %v222 = vunpack.c.l.b16 %v30
    %v223 = vunpack.c.h.b16 %v30
    %v224 = vunpack.c.l.b16 %v31
    %v225 = vunpack.c.h.b16 %v31
    %v226 = vunpack.c.l.b16 %v32
    %v227 = vunpack.c.h.b16 %v32
    %v228 = vunpack.c.l.b16 %v33
    %v229 = vunpack.c.h.b16 %v33
    %v230 = vunpack.c.l.b16 %v34
    %v231 = vunpack.c.h.b16 %v34
    %v232 = vunpack.c.l.b16 %v35
    %v233 = vunpack.c.h.b16 %v35
    %v234 = vunpack.c.l.b16 %v36
    %v235 = vunpack.c.h.b16 %v36
    %v236 = vunpack.c.l.b16 %v37
    %v237 = vunpack.c.h.b16 %v37
    %v238 = vunpack.c.l.b16 %v38
    %v239 = vunpack.c.h.b16 %v38
    %v240 = vunpack.c.l.b16 %v39
    %v241 = vunpack.c.h.b16 %v39
    %v242 = vunpack.c.l.b16 %v40
    %v243 = vunpack.c.h.b16 %v40
    %v244 = vunpack.c.l.b16 %v41
    %v245 = vunpack.c.h.b16 %v41
    %v246 = vunpack.c.l.b16 %v42
    %v247 = vunpack.c.h.b16 %v42
    %v248 = vunpack.c.l.b16 %v43
    %v249 = vunpack.c.h.b16 %v43
    %v250 = vunpack.c.l.b16 %v44
    %v251 = vunpack.c.h.b16 %v44
    %v252 = vunpack.c.l.b16 %v45
    %v253 = vunpack.c.h.b16 %v45
    %v254 = vunpack.c.l.b16 %v46
    %v255 = vunpack.c.h.b16 %v46
    %v256 = vunpack.c.l.b16 %v47
    %v257 = vunpack.c.h.b16 %v47
    %v258 = vunpack.c.l.b16 %v48
    %v259 = vunpack.c.h.b16 %v48
    %v260 = vunpack.c.l.b16 %v49
    %v261 = vunpack.c.h.b16 %v49
    %v262 = vunpack.c.l.b16 %v50
    %v263 = vunpack.c.h.b16 %v50
    %v264 = vunpack.c.l.b16 %v51
    %v265 = vunpack.c.h.b16 %v51
    %v266 = vunpack.c.l.b16 %v52
    %v267 = vunpack.c.h.b16 %v52
    %v268 = vunpack.c.l.b16 %v53
    %v269 = vunpack.c.h.b16 %v53
    %v270 = vunpack.c.l.b16 %v54
    %v271 = vunpack.c.h.b16 %v54
    %v272 = vunpack.c.l.b16 %v55
    %v273 = vunpack.c.h.b16 %v55
    %v274 = vunpack.c.l.b16 %v56
    %v275 = vunpack.c.h.b16 %v56
    %v276 = vunpack.c.l.b16 %v57
    %v277 = vunpack.c.h.b16 %v57
    %v278 = vunpack.c.l.b16 %v58
    %v279 = vunpack.c.h.b16 %v58
    %v280 = vunpack.c.l.b16 %v59
    %v281 = vunpack.c.h.b16 %v59
    %v282 = vunpack.c.l.b16 %v60
    %v283 = vunpack.c.h.b16 %v60
    %v284 = vunpack.c.l.b16 %v61
    %v285 = vunpack.c.h.b16 %v61
    %v286 = vunpack.c.l.b16 %v62
    %v287 = vunpack.c.h.b16 %v62
    %v288 = vunpack.c.l.b16 %v63
    %v289 = vunpack.c.h.b16 %v63
    %v290 = vunpack.c.l.b16 %v64
    %v291 = vunpack.c.h.b16 %v64
    %v292 = vunpack.c.l.b16 %v65
    %v293 = vunpack.c.h.b16 %v65
    %v294 = vunpack.c.l.b16 %v66
    %v295 = vunpack.c.h.b16 %v66
    %v296 = vunpack.c.l.b16 %v67
    %v297 = vunpack.c.h.b16 %v67
    %v298 = vunpack.c.l.b16 %v68
    %v299 = vunpack.c.h.b16 %v68
    %v300 = vunpack.c.l.b16 %v69
    %v301 = vunpack.c.h.b16 %v69
    %v302 = vunpack.c.l.b16 %v70
    %v303 = vunpack.c.h.b16 %v70
    %v304 = vunpack.c.l.b16 %v71
    %v305 = vunpack.c.h.b16 %v71
    %v306 = vunpack.c.l.b16 %v72
    %v307 = vunpack.c.h.b16 %v72
    %v308 = vunpack.c.l.b16 %v73
    %v309 = vunpack.c.h.b16 %v73
    %v310 = vunpack.c.l.b16 %v74
    %v311 = vunpack.c.h.b16 %v74
    %v312 = vunpack.c.l.b16 %v75
    %v313 = vunpack.c.h.b16 %v75
    %v314 = vunpack.c.l.b16 %v76
    %v315 = vunpack.c.h.b16 %v76
    %v316 = vunpack.c.l.b16 %v77
    %v317 = vunpack.c.h.b16 %v77
    %v318 = vunpack.c.l.b16 %v78
    %v319 = vunpack.c.h.b16 %v78
    %v320 = vunpack.c.l.b16 %v79
    %v321 = vunpack.c.h.b16 %v79
    %v322 = vunpack.c.l.b16 %v80
    %v323 = vunpack.c.h.b16 %v80
    %v324 = vunpack.c.l.b16 %v81
    %v325 = vunpack.c.h.b16 %v81
    %v326 = vunpack.c.l.b16 %v82
    %v327 = vunpack.c.h.b16 %v82
    %v328 = vunpack.c.l.b16 %v83
    %v329 = vunpack.c.h.b16 %v83
    %v330 = vpack.c.b16 %v210, %v202
    %v331 = vpack.c.b16 %v211, %v203
    %v332 = vpack.c.b16 %v212, %v204
    %v333 = vpack.c.b16 %v213, %v205
    %v334 = vpack.c.b16 %v214, %v206
    %v335 = vpack.c.b16 %v215, %v207
    %v336 = vpack.c.b16 %v216, %v208
    %v337 = vpack.c.b16 %v217, %v209
    %v338 = vpack.c.b16 %v226, %v218
    %v339 = vpack.c.b16 %v227, %v219
    %v340 = vpack.c.b16 %v228, %v220
    %v341 = vpack.c.b16 %v229, %v221
    %v342 = vpack.c.b16 %v230, %v222
    %v343 = vpack.c.b16 %v231, %v223
    %v344 = vpack.c.b16 %v232, %v224
    %v345 = vpack.c.b16 %v233, %v225
    %v346 = vpack.c.b16 %v242, %v234
    %v347 = vpack.c.b16 %v243, %v235
    %v348 = vpack.c.b16 %v244, %v236
    %v349 = vpack.c.b16 %v245, %v237
    %v350 = vpack.c.b16 %v246, %v238
    %v351 = vpack.c.b16 %v247, %v239
    %v352 = vpack.c.b16 %v248, %v240
    %v353 = vpack.c.b16 %v249, %v241
    %v354 = vpack.c.b16 %v258, %v250
    %v355 = vpack.c.b16 %v259, %v251
    %v356 = vpack.c.b16 %v260, %v252
    %v357 = vpack.c.b16 %v261, %v253
    %v358 = vpack.c.b16 %v262, %v254
    %v359 = vpack.c.b16 %v263, %v255
    %v360 = vpack.c.b16 %v264, %v256
    %v361 = vpack.c.b16 %v265, %v257
    %v362 = vpack.c.b16 %v274, %v266
    %v363 = vpack.c.b16 %v275, %v267
    %v364 = vpack.c.b16 %v276, %v268
    %v365 = vpack.c.b16 %v277, %v269
    %v366 = vpack.c.b16 %v278, %v270
    %v367 = vpack.c.b16 %v279, %v271
    %v368 = vpack.c.b16 %v280, %v272
    %v369 = vpack.c.b16 %v281, %v273
    %v370 = vpack.c.b16 %v290, %v282
    %v371 = vpack.c.b16 %v291, %v283
    %v372 = vpack.c.b16 %v292, %v284
    %v373 = vpack.c.b16 %v293, %v285
    %v374 = vpack.c.b16 %v294, %v286
    %v375 = vpack.c.b16 %v295, %v287
    %v376 = vpack.c.b16 %v296, %v288
    %v377 = vpack.c.b16 %v297, %v289
    %v378 = vpack.c.b16 %v306, %v298
    %v379 = vpack.c.b16 %v307, %v299
    %v380 = vpack.c.b16 %v308, %v300
    %v381 = vpack.c.b16 %v309, %v301
    %v382 = vpack.c.b16 %v310, %v302
    %v383 = vpack.c.b16 %v311, %v303
    %v384 = vpack.c.b16 %v312, %v304
    %v385 = vpack.c.b16 %v313, %v305
    %v386 = vpack.c.b16 %v322, %v314
    %v387 = vpack.c.b16 %v323, %v315
    %v388 = vpack.c.b16 %v324, %v316
    %v389 = vpack.c.b16 %v325, %v317
    %v390 = vpack.c.b16 %v326, %v318
    %v391 = vpack.c.b16 %v327, %v319
    %v392 = vpack.c.b16 %v328, %v320
    %v393 = vpack.c.b16 %v329, %v321
    %458 = vmatprep.subr.bf16.mxu0 %v387
    %459 = vmatpush1.bf16.msra.mxu0 %v386
    %460 = vmatprep.subr.bf16.mxu0 %v379
    %461 = vmatpush1.bf16.msra.mxu0 %v378
    %462 = vmatprep.subr.bf16.mxu0 %v371
    %463 = vmatpush1.bf16.msra.mxu0 %v370
    %464 = vmatprep.subr.bf16.mxu0 %v363
    %465 = vmatpush1.bf16.msra.mxu0 %v362
    %466 = vmatprep.subr.bf16.mxu0 %v355
    %467 = vmatpush1.bf16.msra.mxu0 %v354
    %468 = vmatprep.subr.bf16.mxu0 %v347
    %469 = vmatpush1.bf16.msra.mxu0 %v346
    %470 = vmatprep.subr.bf16.mxu0 %v339
    %471 = vmatpush1.bf16.msra.mxu0 %v338
    %472 = vmatprep.subr.bf16.mxu0 %v331
    %473 = vmatpush1.bf16.msra.mxu0 %v330
    %474 = vmatprep.subr.bf16.mxu0 0
    %475 = vmatpush2.bf16.msra.mxu0 0
    %476 = vmatprep.subr.bf16.mxu0 0
    %477 = vmatpush2.bf16.msra.mxu0 0
    %478 = vmatprep.subr.bf16.mxu0 0
    %479 = vmatpush2.bf16.msra.mxu0 0
    %480 = vmatprep.subr.bf16.mxu0 0
    %481 = vmatpush2.bf16.msra.mxu0 0
    %482 = vmatprep.subr.bf16.mxu0 0
    %483 = vmatpush2.bf16.msra.mxu0 0
    %484 = vmatprep.subr.bf16.mxu0 0
    %485 = vmatpush2.bf16.msra.mxu0 0
    %486 = vmatprep.subr.bf16.mxu0 0
    %487 = vmatpush2.bf16.msra.mxu0 0
    %488 = vmatprep.subr.bf16.mxu0 0
    %489 = vmatpush2.bf16.msra.mxu0 0
    %490 = vmatprep.mubr.bf16.mxu0 0
    %491 = vmatmul.mubr.bf16.gmra.mxu0 %v134
    %v492 = vpop.f32.mrf.mxu0
    %v493 = vadd.f32 %v89, %v492
    %v494 = vpop.f32.mrf.mxu0
    %v495 = vadd.f32 %v93, %v494
    %v496 = vpop.f32.mrf.mxu0
    %v497 = vadd.f32 %v89, %v496
    %v498 = vpop.f32.mrf.mxu0
    %v499 = vadd.f32 %v93, %v498
    %500 = vmatprep.mubr.bf16.mxu0 0
    %501 = vmatmul.mubr.bf16.gmra.mxu0 %v135
    %v502 = vpop.f32.mrf.mxu0
    %v503 = vadd.f32 %v89, %v502
    %v504 = vpop.f32.mrf.mxu0
    %v505 = vadd.f32 %v93, %v504
    %v506 = vpop.f32.mrf.mxu0
    %v507 = vadd.f32 %v89, %v506
    %v508 = vpop.f32.mrf.mxu0
    %v509 = vadd.f32 %v93, %v508
    %510 = vdwg.mxu0
    %511 = vmatprep.subr.bf16.mxu0 %v389
    %512 = vmatpush1.bf16.msra.mxu0 %v388
    %513 = vmatprep.subr.bf16.mxu0 %v381
    %514 = vmatpush1.bf16.msra.mxu0 %v380
    %515 = vmatprep.subr.bf16.mxu0 %v373
    %516 = vmatpush1.bf16.msra.mxu0 %v372
    %517 = vmatprep.subr.bf16.mxu0 %v365
    %518 = vmatpush1.bf16.msra.mxu0 %v364
    %519 = vmatprep.subr.bf16.mxu0 %v357
    %520 = vmatpush1.bf16.msra.mxu0 %v356
    %521 = vmatprep.subr.bf16.mxu0 %v349
    %522 = vmatpush1.bf16.msra.mxu0 %v348
    %523 = vmatprep.subr.bf16.mxu0 %v341
    %524 = vmatpush1.bf16.msra.mxu0 %v340
    %525 = vmatprep.subr.bf16.mxu0 %v333
    %526 = vmatpush1.bf16.msra.mxu0 %v332
    %527 = vmatprep.subr.bf16.mxu0 0
    %528 = vmatpush2.bf16.msra.mxu0 0
    %529 = vmatprep.subr.bf16.mxu0 0
    %530 = vmatpush2.bf16.msra.mxu0 0
    %531 = vmatprep.subr.bf16.mxu0 0
    %532 = vmatpush2.bf16.msra.mxu0 0
    %533 = vmatprep.subr.bf16.mxu0 0
    %534 = vmatpush2.bf16.msra.mxu0 0
    %535 = vmatprep.subr.bf16.mxu0 0
    %536 = vmatpush2.bf16.msra.mxu0 0
    %537 = vmatprep.subr.bf16.mxu0 0
    %538 = vmatpush2.bf16.msra.mxu0 0
    %539 = vmatprep.subr.bf16.mxu0 0
    %540 = vmatpush2.bf16.msra.mxu0 0
    %541 = vmatprep.subr.bf16.mxu0 0
    %542 = vmatpush2.bf16.msra.mxu0 0
    %543 = vmatprep.mubr.bf16.mxu0 0
    %544 = vmatmul.mubr.bf16.gmra.mxu0 %v134
    %v545 = vpop.f32.mrf.mxu0
    %v546 = vadd.f32 %v97, %v545
    %v547 = vpop.f32.mrf.mxu0
    %v548 = vadd.f32 %v101, %v547
    %v549 = vpop.f32.mrf.mxu0
    %v550 = vadd.f32 %v97, %v549
    %v551 = vpop.f32.mrf.mxu0
    %v552 = vadd.f32 %v101, %v551
    %553 = vmatprep.mubr.bf16.mxu0 0
    %554 = vmatmul.mubr.bf16.gmra.mxu0 %v135
    %v555 = vpop.f32.mrf.mxu0
    %v556 = vadd.f32 %v97, %v555
    %v557 = vpop.f32.mrf.mxu0
    %v558 = vadd.f32 %v101, %v557
    %v559 = vpop.f32.mrf.mxu0
    %v560 = vadd.f32 %v97, %v559
    %v561 = vpop.f32.mrf.mxu0
    %v562 = vadd.f32 %v101, %v561
    %563 = vdwg.mxu0
    %564 = vmatprep.subr.bf16.mxu0 %v391
    %565 = vmatpush1.bf16.msra.mxu0 %v390
    %566 = vmatprep.subr.bf16.mxu0 %v383
    %567 = vmatpush1.bf16.msra.mxu0 %v382
    %568 = vmatprep.subr.bf16.mxu0 %v375
    %569 = vmatpush1.bf16.msra.mxu0 %v374
    %570 = vmatprep.subr.bf16.mxu0 %v367
    %571 = vmatpush1.bf16.msra.mxu0 %v366
    %572 = vmatprep.subr.bf16.mxu0 %v359
    %573 = vmatpush1.bf16.msra.mxu0 %v358
    %574 = vmatprep.subr.bf16.mxu0 %v351
    %575 = vmatpush1.bf16.msra.mxu0 %v350
    %576 = vmatprep.subr.bf16.mxu0 %v343
    %577 = vmatpush1.bf16.msra.mxu0 %v342
    %578 = vmatprep.subr.bf16.mxu0 %v335
    %579 = vmatpush1.bf16.msra.mxu0 %v334
    %580 = vmatprep.subr.bf16.mxu0 0
    %581 = vmatpush2.bf16.msra.mxu0 0
    %582 = vmatprep.subr.bf16.mxu0 0
    %583 = vmatpush2.bf16.msra.mxu0 0
    %584 = vmatprep.subr.bf16.mxu0 0
    %585 = vmatpush2.bf16.msra.mxu0 0
    %586 = vmatprep.subr.bf16.mxu0 0
    %587 = vmatpush2.bf16.msra.mxu0 0
    %588 = vmatprep.subr.bf16.mxu0 0
    %589 = vmatpush2.bf16.msra.mxu0 0
    %590 = vmatprep.subr.bf16.mxu0 0
    %591 = vmatpush2.bf16.msra.mxu0 0
    %592 = vmatprep.subr.bf16.mxu0 0
    %593 = vmatpush2.bf16.msra.mxu0 0
    %594 = vmatprep.subr.bf16.mxu0 0
    %595 = vmatpush2.bf16.msra.mxu0 0
    %596 = vmatprep.mubr.bf16.mxu0 0
    %597 = vmatmul.mubr.bf16.gmra.mxu0 %v134
    %v598 = vpop.f32.mrf.mxu0
    %v599 = vadd.f32 %v105, %v598
    %v600 = vpop.f32.mrf.mxu0
    %v601 = vadd.f32 %v109, %v600
    %v602 = vpop.f32.mrf.mxu0
    %v603 = vadd.f32 %v105, %v602
    %v604 = vpop.f32.mrf.mxu0
    %v605 = vadd.f32 %v109, %v604
    %606 = vmatprep.mubr.bf16.mxu0 0
    %607 = vmatmul.mubr.bf16.gmra.mxu0 %v135
    %v608 = vpop.f32.mrf.mxu0
    %v609 = vadd.f32 %v105, %v608
    %v610 = vpop.f32.mrf.mxu0
    %v611 = vadd.f32 %v109, %v610
    %v612 = vpop.f32.mrf.mxu0
    %v613 = vadd.f32 %v105, %v612
    %v614 = vpop.f32.mrf.mxu0
    %v615 = vadd.f32 %v109, %v614
    %616 = vdwg.mxu0
    %617 = vmatprep.subr.bf16.mxu0 %v393
    %618 = vmatpush1.bf16.msra.mxu0 %v392
    %619 = vmatprep.subr.bf16.mxu0 %v385
    %620 = vmatpush1.bf16.msra.mxu0 %v384
    %621 = vmatprep.subr.bf16.mxu0 %v377
    %622 = vmatpush1.bf16.msra.mxu0 %v376
    %623 = vmatprep.subr.bf16.mxu0 %v369
    %624 = vmatpush1.bf16.msra.mxu0 %v368
    %625 = vmatprep.subr.bf16.mxu0 %v361
    %626 = vmatpush1.bf16.msra.mxu0 %v360
    %627 = vmatprep.subr.bf16.mxu0 %v353
    %628 = vmatpush1.bf16.msra.mxu0 %v352
    %629 = vmatprep.subr.bf16.mxu0 %v345
    %630 = vmatpush1.bf16.msra.mxu0 %v344
    %631 = vmatprep.subr.bf16.mxu0 %v337
    %632 = vmatpush1.bf16.msra.mxu0 %v336
    %633 = vmatprep.subr.bf16.mxu0 0
    %634 = vmatpush2.bf16.msra.mxu0 0
    %635 = vmatprep.subr.bf16.mxu0 0
    %636 = vmatpush2.bf16.msra.mxu0 0
    %637 = vmatprep.subr.bf16.mxu0 0
    %638 = vmatpush2.bf16.msra.mxu0 0
    %639 = vmatprep.subr.bf16.mxu0 0
    %640 = vmatpush2.bf16.msra.mxu0 0
    %641 = vmatprep.subr.bf16.mxu0 0
    %642 = vmatpush2.bf16.msra.mxu0 0
    %643 = vmatprep.subr.bf16.mxu0 0
    %644 = vmatpush2.bf16.msra.mxu0 0
    %645 = vmatprep.subr.bf16.mxu0 0
    %646 = vmatpush2.bf16.msra.mxu0 0
    %647 = vmatprep.subr.bf16.mxu0 0
    %648 = vmatpush2.bf16.msra.mxu0 0
    %649 = vmatprep.mubr.bf16.mxu0 0
    %650 = vmatmul.mubr.bf16.gmra.mxu0 %v134
    %v651 = vpop.f32.mrf.mxu0
    %v652 = vadd.f32 %v113, %v651
    %v653 = vpop.f32.mrf.mxu0
    %v654 = vadd.f32 %v117, %v653
    %v655 = vpop.f32.mrf.mxu0
    %v656 = vadd.f32 %v113, %v655
    %v657 = vpop.f32.mrf.mxu0
    %v658 = vadd.f32 %v117, %v657
    %659 = vmatprep.mubr.bf16.mxu0 0
    %660 = vmatmul.mubr.bf16.gmra.mxu0 %v135
    %v661 = vpop.f32.mrf.mxu0
    %v662 = vadd.f32 %v113, %v661
    %v663 = vpop.f32.mrf.mxu0
    %v664 = vadd.f32 %v117, %v663
    %v665 = vpop.f32.mrf.mxu0
    %v666 = vadd.f32 %v113, %v665
    %v667 = vpop.f32.mrf.mxu0
    %v668 = vadd.f32 %v117, %v667
    %669 = vdwg.mxu0
    %670 = vst [vmem:[#allocation2] sm:$0xff] %v493
    %671 = vst [vmem:[#allocation2 + $0x8] sm:$0xff] %v495
    %672 = vst [vmem:[#allocation2 + $0x10] sm:$0xff] %v546
    %673 = vst [vmem:[#allocation2 + $0x18] sm:$0xff] %v548
    %674 = vst [vmem:[#allocation2 + $0x20] sm:$0xff] %v599
    %675 = vst [vmem:[#allocation2 + $0x28] sm:$0xff] %v601
    %676 = vst [vmem:[#allocation2 + $0x30] sm:$0xff] %v652
    %677 = vst [vmem:[#allocation2 + $0x38] sm:$0xff] %v654
    %678 = vst [vmem:[#allocation2 + $0x40] sm:$0xff] %v497
    %679 = vst [vmem:[#allocation2 + $0x48] sm:$0xff] %v499
    %680 = vst [vmem:[#allocation2 + $0x50] sm:$0xff] %v550
    %681 = vst [vmem:[#allocation2 + $0x58] sm:$0xff] %v552
    %682 = vst [vmem:[#allocation2 + $0x60] sm:$0xff] %v603
    %683 = vst [vmem:[#allocation2 + $0x68] sm:$0xff] %v605
    %684 = vst [vmem:[#allocation2 + $0x70] sm:$0xff] %v656
    %685 = vst [vmem:[#allocation2 + $0x78] sm:$0xff] %v658
    %686 = vst [vmem:[#allocation2 + $0x80] sm:$0xff] %v503
    %687 = vst [vmem:[#allocation2 + $0x88] sm:$0xff] %v505
    %688 = vst [vmem:[#allocation2 + $0x90] sm:$0xff] %v556
    %689 = vst [vmem:[#allocation2 + $0x98] sm:$0xff] %v558
    %690 = vst [vmem:[#allocation2 + $0xa0] sm:$0xff] %v609
    %691 = vst [vmem:[#allocation2 + $0xa8] sm:$0xff] %v611
    %692 = vst [vmem:[#allocation2 + $0xb0] sm:$0xff] %v662
    %693 = vst [vmem:[#allocation2 + $0xb8] sm:$0xff] %v664
    %694 = vst [vmem:[#allocation2 + $0xc0] sm:$0xff] %v507
    %695 = vst [vmem:[#allocation2 + $0xc8] sm:$0xff] %v509
    %696 = vst [vmem:[#allocation2 + $0xd0] sm:$0xff] %v560
    %697 = vst [vmem:[#allocation2 + $0xd8] sm:$0xff] %v562
    %698 = vst [vmem:[#allocation2 + $0xe0] sm:$0xff] %v613
    %699 = vst [vmem:[#allocation2 + $0xe8] sm:$0xff] %v615
    %700 = vst [vmem:[#allocation2 + $0xf0] sm:$0xff] %v666
    %701 = vst [vmem:[#allocation2 + $0xf8] sm:$0xff] %v668
    // Predicated region
    $region14: #{_tied_ae_forward.3} parent=1 // pred_check
      _
    $region15: #{_tied_ae_forward.3} parent=1 // pred_check_branch
      %703 = sbr.rel (0) target = $region17
    $region16: #{_tied_ae_forward.3} parent=1 // pred_region
      %s705 = ssub.s32 4096, 4096
      %706 = vsyncadd [#allocation3], %s705
      %s707 = sshll.u32 [#allocation2], 4
      %s708 = int_to_ptr.vmem [resolvable:$true] %s707
      %713 = dma.vmem_to_hbm [thread:$0]  %s708, 4096, %s3, [#allocation3], 1024, 1024, 64
    $region17: #{_tied_ae_forward.3} parent=1 // pred_fallthru
      _
    // Predicated region
    $region18: #{_tied_ae_forward.3} parent=1 // pred_check
      _
    $region19: #{_tied_ae_forward.3} parent=1 // pred_check_branch
      %715 = sbr.rel (0) target = $region21
    $region20: #{_tied_ae_forward.3} parent=1 // pred_region
      %716 = dma.done [#allocation3], 4096
    $region21: #{_tied_ae_forward.3} parent=1 // pred_fallthru
      _
    %717 = vsyncpa [#allocation3], 1

// kernel: _tied_ae_forward.2
$region0: #{_tied_ae_forward.2}
  #allocation0 [shape = 'u32[]', space=smem, size = 0x4, offset = 0x4, fixed_abs, tag = 'smem constant byte address 0x4 - core index']
  #allocation1 [shape = 'u32[144,128]{1,0:T(1,128)}', space=vmem, size = 0x12000, scoped, tag = 'internal scratch']
  #allocation2 [shape = 'f32[32,128]{1,0:T(8,128)}', space=vmem, size = 0x4000, scoped, tag = 'scratch operand']
  %s0 = inlined_call_operand.hbm [shape: f32[32,1024], index: 0, kind: input, shape index: {}]
  %s1 = inlined_call_operand.hbm [shape: bf16[1024,128], index: 1, kind: input, shape index: {}]
  %s2 = inlined_call_operand.vmem [shape: f32[1,128], index: 2, kind: input, shape index: {}]
  %s3 = inlined_call_operand.vmem [shape: bf16[32,128], index: 3, kind: output, shape index: {}]
  %s4 = sld [smem:[#allocation0]]
  $region38: #{_tied_ae_forward.2} parent=0
    _
  %s6 = ssub.s32 1, %s4
  %s7 = scalar_select 0, %s6, %s4
  $region1: #{_tied_ae_forward.2} parent=0
    #allocation3 [shape = 'u8[131072]{0}', space=vmem, size = 0x20000, scoped, tag = 'input window, operand 0, single buffered']
    #allocation4 [shape = 's32[1]{0}', space=sflag, size = 0x4, scoped, tag = 'scoped memory for _tied_ae_forward.2']
    #allocation5 [shape = 'u8[262144]{0}', space=vmem, size = 0x40000, scoped, tag = 'input window, operand 1, single buffered']
    #allocation6 [shape = 's32[1]{0}', space=sflag, size = 0x4, scoped, tag = 'scoped memory for _tied_ae_forward.2']
    %8 = vsyncpa [#allocation4], 0
    %9 = vsyncpa [#allocation6], 0
    // Predicated region
    $region2: #{_tied_ae_forward.2} parent=1 // pred_check
      _
    $region3: #{_tied_ae_forward.2} parent=1 // pred_check_branch
      %11 = sbr.rel (0) target = $region5
    $region4: #{_tied_ae_forward.2} parent=1 // pred_region
      %s13 = ssub.s32 4096, 4096
      %14 = vsyncadd [#allocation4], %s13
      %s15 = sshll.u32 [#allocation3], 4
      %s16 = int_to_ptr.vmem [resolvable:$true] %s15
      %21 = dma.hbm_to_vmem [thread:$0]  %s0, 4096, %s16, [#allocation4], 1024, 1024, 64
    $region5: #{_tied_ae_forward.2} parent=1 // pred_fallthru
      _
    // Predicated region
    $region6: #{_tied_ae_forward.2} parent=1 // pred_check
      _
    $region7: #{_tied_ae_forward.2} parent=1 // pred_check_branch
      %23 = sbr.rel (0) target = $region9
    $region8: #{_tied_ae_forward.2} parent=1 // pred_region
      %s25 = ssub.s32 8192, 8192
      %26 = vsyncadd [#allocation6], %s25
      %s27 = sshll.u32 [#allocation5], 4
      %s28 = int_to_ptr.vmem [resolvable:$true] %s27
      %33 = dma.hbm_to_vmem [thread:$0]  %s1, 8192, %s28, [#allocation6], 64, 64, 4
    $region9: #{_tied_ae_forward.2} parent=1 // pred_fallthru
      _
    // Predicated region
    $region10: #{_tied_ae_forward.2} parent=1 // pred_check
      _
    $region11: #{_tied_ae_forward.2} parent=1 // pred_check_branch
      %35 = sbr.rel (0) target = $region13
    $region12: #{_tied_ae_forward.2} parent=1 // pred_region
      _
    $region13: #{_tied_ae_forward.2} parent=1 // pred_fallthru
      _
    // Predicated region
    $region14: #{_tied_ae_forward.2} parent=1 // pred_check
      _
    $region15: #{_tied_ae_forward.2} parent=1 // pred_check_branch
      %37 = sbr.rel (0) target = $region17
    $region16: #{_tied_ae_forward.2} parent=1 // pred_region
      %38 = dma.done [#allocation4], 4096
    $region17: #{_tied_ae_forward.2} parent=1 // pred_fallthru
      _
    // Predicated region
    $region18: #{_tied_ae_forward.2} parent=1 // pred_check
      _
    $region19: #{_tied_ae_forward.2} parent=1 // pred_check_branch
      %40 = sbr.rel (0) target = $region21
    $region20: #{_tied_ae_forward.2} parent=1 // pred_region
      %41 = dma.done [#allocation6], 8192
    $region21: #{_tied_ae_forward.2} parent=1 // pred_fallthru
      _
    %p43 = scmp.eq.s32.totalorder 0, 0
    // Predicated region
    $region22: #{_tied_ae_forward.2} parent=1 // pred_check
      %p44 = pneg %p43
    $region23: #{_tied_ae_forward.2} parent=1 // pred_check_branch
      %46 = sbr.rel (%p44) target = $region25
    $region24: #{_tied_ae_forward.2} parent=1 // pred_region
      %47 = vst [vmem:[#allocation2] sm:$0xff] 0.0
      %48 = vst [vmem:[#allocation2 + $0x8] sm:$0xff] 0.0
      %49 = vst [vmem:[#allocation2 + $0x10] sm:$0xff] 0.0
      %50 = vst [vmem:[#allocation2 + $0x18] sm:$0xff] 0.0
    $region25: #{_tied_ae_forward.2} parent=1 // pred_fallthru
      _
    %v51 = vld [vmem:[#allocation2] sm:$0xff]
    %v52 = vld [vmem:[#allocation2 + $0x8] sm:$0xff]
    %v53 = vld [vmem:[#allocation2 + $0x10] sm:$0xff]
    %v54 = vld [vmem:[#allocation2 + $0x18] sm:$0xff]
    %v55 = vld [vmem:[#allocation3] sm:$0xff]
    %v56 = vld [vmem:[#allocation3 + $0x8] sm:$0xff]
    %v57 = vld [vmem:[#allocation3 + $0x10] sm:$0xff]
    %v58 = vld [vmem:[#allocation3 + $0x18] sm:$0xff]
    %v59 = vld [vmem:[#allocation3 + $0x20] sm:$0xff]
    %v60 = vld [vmem:[#allocation3 + $0x28] sm:$0xff]
    %v61 = vld [vmem:[#allocation3 + $0x30] sm:$0xff]
    %v62 = vld [vmem:[#allocation3 + $0x38] sm:$0xff]
    %v63 = vld [vmem:[#allocation3 + $0x40] sm:$0xff]
    %v64 = vld [vmem:[#allocation3 + $0x48] sm:$0xff]
    %v65 = vld [vmem:[#allocation3 + $0x50] sm:$0xff]
    %v66 = vld [vmem:[#allocation3 + $0x58] sm:$0xff]
    %v67 = vld [vmem:[#allocation3 + $0x60] sm:$0xff]
    %v68 = vld [vmem:[#allocation3 + $0x68] sm:$0xff]
    %v69 = vld [vmem:[#allocation3 + $0x70] sm:$0xff]
    %v70 = vld [vmem:[#allocation3 + $0x78] sm:$0xff]
    %v71 = vld [vmem:[#allocation3 + $0x80] sm:$0xff]
    %v72 = vld [vmem:[#allocation3 + $0x88] sm:$0xff]
    %v73 = vld [vmem:[#allocation3 + $0x90] sm:$0xff]
    %v74 = vld [vmem:[#allocation3 + $0x98] sm:$0xff]
    %v75 = vld [vmem:[#allocation3 + $0xa0] sm:$0xff]
    %v76 = vld [vmem:[#allocation3 + $0xa8] sm:$0xff]
    %v77 = vld [vmem:[#allocation3 + $0xb0] sm:$0xff]
    %v78 = vld [vmem:[#allocation3 + $0xb8] sm:$0xff]
    %v79 = vld [vmem:[#allocation3 + $0xc0] sm:$0xff]
    %v80 = vld [vmem:[#allocation3 + $0xc8] sm:$0xff]
    %v81 = vld [vmem:[#allocation3 + $0xd0] sm:$0xff]
    %v82 = vld [vmem:[#allocation3 + $0xd8] sm:$0xff]
    %v83 = vld [vmem:[#allocation3 + $0xe0] sm:$0xff]
    %v84 = vld [vmem:[#allocation3 + $0xe8] sm:$0xff]
    %v85 = vld [vmem:[#allocation3 + $0xf0] sm:$0xff]
    %v86 = vld [vmem:[#allocation3 + $0xf8] sm:$0xff]
    %v87 = vpack.c.bf16 %v63, %v55
    %v88 = vpack.c.bf16 %v64, %v56
    %v89 = vpack.c.bf16 %v65, %v57
    %v90 = vpack.c.bf16 %v66, %v58
    %v91 = vpack.c.bf16 %v67, %v59
    %v92 = vpack.c.bf16 %v68, %v60
    %v93 = vpack.c.bf16 %v69, %v61
    %v94 = vpack.c.bf16 %v70, %v62
    %v95 = vpack.c.bf16 %v79, %v71
    %v96 = vpack.c.bf16 %v80, %v72
    %v97 = vpack.c.bf16 %v81, %v73
    %v98 = vpack.c.bf16 %v82, %v74
    %v99 = vpack.c.bf16 %v83, %v75
    %v100 = vpack.c.bf16 %v84, %v76
    %v101 = vpack.c.bf16 %v85, %v77
    %v102 = vpack.c.bf16 %v86, %v78
    %v103 = vld [vmem:[#allocation5] sm:$0xf]
    %v104 = vld [vmem:[#allocation5 + $0x4] sm:$0xf]
    %v105 = vld [vmem:[#allocation5 + $0x8] sm:$0xf]
    %v106 = vld [vmem:[#allocation5 + $0xc] sm:$0xf]
    %v107 = vld [vmem:[#allocation5 + $0x10] sm:$0xf]
    %v108 = vld [vmem:[#allocation5 + $0x14] sm:$0xf]
    %v109 = vld [vmem:[#allocation5 + $0x18] sm:$0xf]
    %v110 = vld [vmem:[#allocation5 + $0x1c] sm:$0xf]
    %v111 = vld [vmem:[#allocation5 + $0x20] sm:$0xf]
    %v112 = vld [vmem:[#allocation5 + $0x24] sm:$0xf]
    %v113 = vld [vmem:[#allocation5 + $0x28] sm:$0xf]
    %v114 = vld [vmem:[#allocation5 + $0x2c] sm:$0xf]
    %v115 = vld [vmem:[#allocation5 + $0x30] sm:$0xf]
    %v116 = vld [vmem:[#allocation5 + $0x34] sm:$0xf]
    %v117 = vld [vmem:[#allocation5 + $0x38] sm:$0xf]
    %v118 = vld [vmem:[#allocation5 + $0x3c] sm:$0xf]
    %v119 = vld [vmem:[#allocation5 + $0x40] sm:$0xf]
    %v120 = vld [vmem:[#allocation5 + $0x44] sm:$0xf]
    %v121 = vld [vmem:[#allocation5 + $0x48] sm:$0xf]
    %v122 = vld [vmem:[#allocation5 + $0x4c] sm:$0xf]
    %v123 = vld [vmem:[#allocation5 + $0x50] sm:$0xf]
    %v124 = vld [vmem:[#allocation5 + $0x54] sm:$0xf]
    %v125 = vld [vmem:[#allocation5 + $0x58] sm:$0xf]
    %v126 = vld [vmem:[#allocation5 + $0x5c] sm:$0xf]
    %v127 = vld [vmem:[#allocation5 + $0x60] sm:$0xf]
    %v128 = vld [vmem:[#allocation5 + $0x64] sm:$0xf]
    %v129 = vld [vmem:[#allocation5 + $0x68] sm:$0xf]
    %v130 = vld [vmem:[#allocation5 + $0x6c] sm:$0xf]
    %v131 = vld [vmem:[#allocation5 + $0x70] sm:$0xf]
    %v132 = vld [vmem:[#allocation5 + $0x74] sm:$0xf]
    %v133 = vld [vmem:[#allocation5 + $0x78] sm:$0xf]
    %v134 = vld [vmem:[#allocation5 + $0x7c] sm:$0xf]
    %v135 = vld [vmem:[#allocation5 + $0x80] sm:$0xf]
    %v136 = vld [vmem:[#allocation5 + $0x84] sm:$0xf]
    %v137 = vld [vmem:[#allocation5 + $0x88] sm:$0xf]
    %v138 = vld [vmem:[#allocation5 + $0x8c] sm:$0xf]
    %v139 = vld [vmem:[#allocation5 + $0x90] sm:$0xf]
    %v140 = vld [vmem:[#allocation5 + $0x94] sm:$0xf]
    %v141 = vld [vmem:[#allocation5 + $0x98] sm:$0xf]
    %v142 = vld [vmem:[#allocation5 + $0x9c] sm:$0xf]
    %v143 = vld [vmem:[#allocation5 + $0xa0] sm:$0xf]
    %v144 = vld [vmem:[#allocation5 + $0xa4] sm:$0xf]
    %v145 = vld [vmem:[#allocation5 + $0xa8] sm:$0xf]
    %v146 = vld [vmem:[#allocation5 + $0xac] sm:$0xf]
    %v147 = vld [vmem:[#allocation5 + $0xb0] sm:$0xf]
    %v148 = vld [vmem:[#allocation5 + $0xb4] sm:$0xf]
    %v149 = vld [vmem:[#allocation5 + $0xb8] sm:$0xf]
    %v150 = vld [vmem:[#allocation5 + $0xbc] sm:$0xf]
    %v151 = vld [vmem:[#allocation5 + $0xc0] sm:$0xf]
    %v152 = vld [vmem:[#allocation5 + $0xc4] sm:$0xf]
    %v153 = vld [vmem:[#allocation5 + $0xc8] sm:$0xf]
    %v154 = vld [vmem:[#allocation5 + $0xcc] sm:$0xf]
    %v155 = vld [vmem:[#allocation5 + $0xd0] sm:$0xf]
    %v156 = vld [vmem:[#allocation5 + $0xd4] sm:$0xf]
    %v157 = vld [vmem:[#allocation5 + $0xd8] sm:$0xf]
    %v158 = vld [vmem:[#allocation5 + $0xdc] sm:$0xf]
    %v159 = vld [vmem:[#allocation5 + $0xe0] sm:$0xf]
    %v160 = vld [vmem:[#allocation5 + $0xe4] sm:$0xf]
    %v161 = vld [vmem:[#allocation5 + $0xe8] sm:$0xf]
    %v162 = vld [vmem:[#allocation5 + $0xec] sm:$0xf]
    %v163 = vld [vmem:[#allocation5 + $0xf0] sm:$0xf]
    %v164 = vld [vmem:[#allocation5 + $0xf4] sm:$0xf]
    %v165 = vld [vmem:[#allocation5 + $0xf8] sm:$0xf]
    %v166 = vld [vmem:[#allocation5 + $0xfc] sm:$0xf]
    %v167 = vld [vmem:[#allocation5 + $0x100] sm:$0xf]
    %v168 = vld [vmem:[#allocation5 + $0x104] sm:$0xf]
    %v169 = vld [vmem:[#allocation5 + $0x108] sm:$0xf]
    %v170 = vld [vmem:[#allocation5 + $0x10c] sm:$0xf]
    %v171 = vld [vmem:[#allocation5 + $0x110] sm:$0xf]
    %v172 = vld [vmem:[#allocation5 + $0x114] sm:$0xf]
    %v173 = vld [vmem:[#allocation5 + $0x118] sm:$0xf]
    %v174 = vld [vmem:[#allocation5 + $0x11c] sm:$0xf]
    %v175 = vld [vmem:[#allocation5 + $0x120] sm:$0xf]
    %v176 = vld [vmem:[#allocation5 + $0x124] sm:$0xf]
    %v177 = vld [vmem:[#allocation5 + $0x128] sm:$0xf]
    %v178 = vld [vmem:[#allocation5 + $0x12c] sm:$0xf]
    %v179 = vld [vmem:[#allocation5 + $0x130] sm:$0xf]
    %v180 = vld [vmem:[#allocation5 + $0x134] sm:$0xf]
    %v181 = vld [vmem:[#allocation5 + $0x138] sm:$0xf]
    %v182 = vld [vmem:[#allocation5 + $0x13c] sm:$0xf]
    %v183 = vld [vmem:[#allocation5 + $0x140] sm:$0xf]
    %v184 = vld [vmem:[#allocation5 + $0x144] sm:$0xf]
    %v185 = vld [vmem:[#allocation5 + $0x148] sm:$0xf]
    %v186 = vld [vmem:[#allocation5 + $0x14c] sm:$0xf]
    %v187 = vld [vmem:[#allocation5 + $0x150] sm:$0xf]
    %v188 = vld [vmem:[#allocation5 + $0x154] sm:$0xf]
    %v189 = vld [vmem:[#allocation5 + $0x158] sm:$0xf]
    %v190 = vld [vmem:[#allocation5 + $0x15c] sm:$0xf]
    %v191 = vld [vmem:[#allocation5 + $0x160] sm:$0xf]
    %v192 = vld [vmem:[#allocation5 + $0x164] sm:$0xf]
    %v193 = vld [vmem:[#allocation5 + $0x168] sm:$0xf]
    %v194 = vld [vmem:[#allocation5 + $0x16c] sm:$0xf]
    %v195 = vld [vmem:[#allocation5 + $0x170] sm:$0xf]
    %v196 = vld [vmem:[#allocation5 + $0x174] sm:$0xf]
    %v197 = vld [vmem:[#allocation5 + $0x178] sm:$0xf]
    %v198 = vld [vmem:[#allocation5 + $0x17c] sm:$0xf]
    %v199 = vld [vmem:[#allocation5 + $0x180] sm:$0xf]
    %v200 = vld [vmem:[#allocation5 + $0x184] sm:$0xf]
    %v201 = vld [vmem:[#allocation5 + $0x188] sm:$0xf]
    %v202 = vld [vmem:[#allocation5 + $0x18c] sm:$0xf]
    %v203 = vld [vmem:[#allocation5 + $0x190] sm:$0xf]
    %v204 = vld [vmem:[#allocation5 + $0x194] sm:$0xf]
    %v205 = vld [vmem:[#allocation5 + $0x198] sm:$0xf]
    %v206 = vld [vmem:[#allocation5 + $0x19c] sm:$0xf]
    %v207 = vld [vmem:[#allocation5 + $0x1a0] sm:$0xf]
    %v208 = vld [vmem:[#allocation5 + $0x1a4] sm:$0xf]
    %v209 = vld [vmem:[#allocation5 + $0x1a8] sm:$0xf]
    %v210 = vld [vmem:[#allocation5 + $0x1ac] sm:$0xf]
    %v211 = vld [vmem:[#allocation5 + $0x1b0] sm:$0xf]
    %v212 = vld [vmem:[#allocation5 + $0x1b4] sm:$0xf]
    %v213 = vld [vmem:[#allocation5 + $0x1b8] sm:$0xf]
    %v214 = vld [vmem:[#allocation5 + $0x1bc] sm:$0xf]
    %v215 = vld [vmem:[#allocation5 + $0x1c0] sm:$0xf]
    %v216 = vld [vmem:[#allocation5 + $0x1c4] sm:$0xf]
    %v217 = vld [vmem:[#allocation5 + $0x1c8] sm:$0xf]
    %v218 = vld [vmem:[#allocation5 + $0x1cc] sm:$0xf]
    %v219 = vld [vmem:[#allocation5 + $0x1d0] sm:$0xf]
    %v220 = vld [vmem:[#allocation5 + $0x1d4] sm:$0xf]
    %v221 = vld [vmem:[#allocation5 + $0x1d8] sm:$0xf]
    %v222 = vld [vmem:[#allocation5 + $0x1dc] sm:$0xf]
    %v223 = vld [vmem:[#allocation5 + $0x1e0] sm:$0xf]
    %v224 = vld [vmem:[#allocation5 + $0x1e4] sm:$0xf]
    %v225 = vld [vmem:[#allocation5 + $0x1e8] sm:$0xf]
    %v226 = vld [vmem:[#allocation5 + $0x1ec] sm:$0xf]
    %v227 = vld [vmem:[#allocation5 + $0x1f0] sm:$0xf]
    %v228 = vld [vmem:[#allocation5 + $0x1f4] sm:$0xf]
    %v229 = vld [vmem:[#allocation5 + $0x1f8] sm:$0xf]
    %v230 = vld [vmem:[#allocation5 + $0x1fc] sm:$0xf]
    %v359 = vunpack.c.l.b16 %v103
    %v360 = vunpack.c.l.b16 %v104
    %v361 = vunpack.c.l.b16 %v105
    %v362 = vunpack.c.l.b16 %v106
    %v363 = vunpack.c.l.b16 %v107
    %v364 = vunpack.c.l.b16 %v108
    %v365 = vunpack.c.l.b16 %v109
    %v366 = vunpack.c.l.b16 %v110
    %v367 = vunpack.c.l.b16 %v111
    %v368 = vunpack.c.l.b16 %v112
    %v369 = vunpack.c.l.b16 %v113
    %v370 = vunpack.c.l.b16 %v114
    %v371 = vunpack.c.l.b16 %v115
    %v372 = vunpack.c.l.b16 %v116
    %v373 = vunpack.c.l.b16 %v117
    %v374 = vunpack.c.l.b16 %v118
    %v375 = vunpack.c.l.b16 %v119
    %v376 = vunpack.c.l.b16 %v120
    %v377 = vunpack.c.l.b16 %v121
    %v378 = vunpack.c.l.b16 %v122
    %v379 = vunpack.c.l.b16 %v123
    %v380 = vunpack.c.l.b16 %v124
    %v381 = vunpack.c.l.b16 %v125
    %v382 = vunpack.c.l.b16 %v126
    %v383 = vunpack.c.l.b16 %v127
    %v384 = vunpack.c.l.b16 %v128
    %v385 = vunpack.c.l.b16 %v129
    %v386 = vunpack.c.l.b16 %v130
    %v387 = vunpack.c.l.b16 %v131
    %v388 = vunpack.c.l.b16 %v132
    %v389 = vunpack.c.l.b16 %v133
    %v390 = vunpack.c.l.b16 %v134
    %v391 = vunpack.c.l.b16 %v135
    %v392 = vunpack.c.l.b16 %v136
    %v393 = vunpack.c.l.b16 %v137
    %v394 = vunpack.c.l.b16 %v138
    %v395 = vunpack.c.l.b16 %v139
    %v396 = vunpack.c.l.b16 %v140
    %v397 = vunpack.c.l.b16 %v141
    %v398 = vunpack.c.l.b16 %v142
    %v399 = vunpack.c.l.b16 %v143
    %v400 = vunpack.c.l.b16 %v144
    %v401 = vunpack.c.l.b16 %v145
    %v402 = vunpack.c.l.b16 %v146
    %v403 = vunpack.c.l.b16 %v147
    %v404 = vunpack.c.l.b16 %v148
    %v405 = vunpack.c.l.b16 %v149
    %v406 = vunpack.c.l.b16 %v150
    %v407 = vunpack.c.l.b16 %v151
    %v408 = vunpack.c.l.b16 %v152
    %v409 = vunpack.c.l.b16 %v153
    %v410 = vunpack.c.l.b16 %v154
    %v411 = vunpack.c.l.b16 %v155
    %v412 = vunpack.c.l.b16 %v156
    %v413 = vunpack.c.l.b16 %v157
    %v414 = vunpack.c.l.b16 %v158
    %v415 = vunpack.c.l.b16 %v159
    %v416 = vunpack.c.l.b16 %v160
    %v417 = vunpack.c.l.b16 %v161
    %v418 = vunpack.c.l.b16 %v162
    %v419 = vunpack.c.l.b16 %v163
    %v420 = vunpack.c.l.b16 %v164
    %v421 = vunpack.c.l.b16 %v165
    %v422 = vunpack.c.l.b16 %v166
    %v423 = vunpack.c.l.b16 %v167
    %v424 = vunpack.c.l.b16 %v168
    %v425 = vunpack.c.l.b16 %v169
    %v426 = vunpack.c.l.b16 %v170
    %v427 = vunpack.c.l.b16 %v171
    %v428 = vunpack.c.l.b16 %v172
    %v429 = vunpack.c.l.b16 %v173
    %v430 = vunpack.c.l.b16 %v174
    %v431 = vunpack.c.l.b16 %v175
    %v432 = vunpack.c.l.b16 %v176
    %v433 = vunpack.c.l.b16 %v177
    %v434 = vunpack.c.l.b16 %v178
    %v435 = vunpack.c.l.b16 %v179
    %v436 = vunpack.c.l.b16 %v180
    %v437 = vunpack.c.l.b16 %v181
    %v438 = vunpack.c.l.b16 %v182
    %v439 = vunpack.c.l.b16 %v183
    %v440 = vunpack.c.l.b16 %v184
    %v441 = vunpack.c.l.b16 %v185
    %v442 = vunpack.c.l.b16 %v186
    %v443 = vunpack.c.l.b16 %v187
    %v444 = vunpack.c.l.b16 %v188
    %v445 = vunpack.c.l.b16 %v189
    %v446 = vunpack.c.l.b16 %v190
    %v447 = vunpack.c.l.b16 %v191
    %v448 = vunpack.c.l.b16 %v192
    %v449 = vunpack.c.l.b16 %v193
    %v450 = vunpack.c.l.b16 %v194
    %v451 = vunpack.c.l.b16 %v195
    %v452 = vunpack.c.l.b16 %v196
    %v453 = vunpack.c.l.b16 %v197
    %v454 = vunpack.c.l.b16 %v198
    %v455 = vunpack.c.l.b16 %v199
    %v456 = vunpack.c.l.b16 %v200
    %v457 = vunpack.c.l.b16 %v201
    %v458 = vunpack.c.l.b16 %v202
    %v459 = vunpack.c.l.b16 %v203
    %v460 = vunpack.c.l.b16 %v204
    %v461 = vunpack.c.l.b16 %v205
    %v462 = vunpack.c.l.b16 %v206
    %v463 = vunpack.c.l.b16 %v207
    %v464 = vunpack.c.l.b16 %v208
    %v465 = vunpack.c.l.b16 %v209
    %v466 = vunpack.c.l.b16 %v210
    %v467 = vunpack.c.l.b16 %v211
    %v468 = vunpack.c.l.b16 %v212
    %v469 = vunpack.c.l.b16 %v213
    %v470 = vunpack.c.l.b16 %v214
    %v471 = vunpack.c.l.b16 %v215
    %v472 = vunpack.c.l.b16 %v216
    %v473 = vunpack.c.l.b16 %v217
    %v474 = vunpack.c.l.b16 %v218
    %v475 = vunpack.c.l.b16 %v219
    %v476 = vunpack.c.l.b16 %v220
    %v477 = vunpack.c.l.b16 %v221
    %v478 = vunpack.c.l.b16 %v222
    %v479 = vunpack.c.l.b16 %v223
    %v480 = vunpack.c.l.b16 %v224
    %v481 = vunpack.c.l.b16 %v225
    %v482 = vunpack.c.l.b16 %v226
    %v483 = vunpack.c.l.b16 %v227
    %v484 = vunpack.c.l.b16 %v228
    %v485 = vunpack.c.l.b16 %v229
    %v486 = vunpack.c.l.b16 %v230
    %v487 = vpack.c.b16 %v360, %v359
    %v488 = vpack.c.b16 %v362, %v361
    %v489 = vpack.c.b16 %v364, %v363
    %v490 = vpack.c.b16 %v366, %v365
    %v491 = vpack.c.b16 %v368, %v367
    %v492 = vpack.c.b16 %v370, %v369
    %v493 = vpack.c.b16 %v372, %v371
    %v494 = vpack.c.b16 %v374, %v373
    %v495 = vpack.c.b16 %v376, %v375
    %v496 = vpack.c.b16 %v378, %v377
    %v497 = vpack.c.b16 %v380, %v379
    %v498 = vpack.c.b16 %v382, %v381
    %v499 = vpack.c.b16 %v384, %v383
    %v500 = vpack.c.b16 %v386, %v385
    %v501 = vpack.c.b16 %v388, %v387
    %v502 = vpack.c.b16 %v390, %v389
    %v503 = vpack.c.b16 %v392, %v391
    %v504 = vpack.c.b16 %v394, %v393
    %v505 = vpack.c.b16 %v396, %v395
    %v506 = vpack.c.b16 %v398, %v397
    %v507 = vpack.c.b16 %v400, %v399
    %v508 = vpack.c.b16 %v402, %v401
    %v509 = vpack.c.b16 %v404, %v403
    %v510 = vpack.c.b16 %v406, %v405
    %v511 = vpack.c.b16 %v408, %v407
    %v512 = vpack.c.b16 %v410, %v409
    %v513 = vpack.c.b16 %v412, %v411
    %v514 = vpack.c.b16 %v414, %v413
    %v515 = vpack.c.b16 %v416, %v415
    %v516 = vpack.c.b16 %v418, %v417
    %v517 = vpack.c.b16 %v420, %v419
    %v518 = vpack.c.b16 %v422, %v421
    %v519 = vpack.c.b16 %v424, %v423
    %v520 = vpack.c.b16 %v426, %v425
    %v521 = vpack.c.b16 %v428, %v427
    %v522 = vpack.c.b16 %v430, %v429
    %v523 = vpack.c.b16 %v432, %v431
    %v524 = vpack.c.b16 %v434, %v433
    %v525 = vpack.c.b16 %v436, %v435
    %v526 = vpack.c.b16 %v438, %v437
    %v527 = vpack.c.b16 %v440, %v439
    %v528 = vpack.c.b16 %v442, %v441
    %v529 = vpack.c.b16 %v444, %v443
    %v530 = vpack.c.b16 %v446, %v445
    %v531 = vpack.c.b16 %v448, %v447
    %v532 = vpack.c.b16 %v450, %v449
    %v533 = vpack.c.b16 %v452, %v451
    %v534 = vpack.c.b16 %v454, %v453
    %v535 = vpack.c.b16 %v456, %v455
    %v536 = vpack.c.b16 %v458, %v457
    %v537 = vpack.c.b16 %v460, %v459
    %v538 = vpack.c.b16 %v462, %v461
    %v539 = vpack.c.b16 %v464, %v463
    %v540 = vpack.c.b16 %v466, %v465
    %v541 = vpack.c.b16 %v468, %v467
    %v542 = vpack.c.b16 %v470, %v469
    %v543 = vpack.c.b16 %v472, %v471
    %v544 = vpack.c.b16 %v474, %v473
    %v545 = vpack.c.b16 %v476, %v475
    %v546 = vpack.c.b16 %v478, %v477
    %v547 = vpack.c.b16 %v480, %v479
    %v548 = vpack.c.b16 %v482, %v481
    %v549 = vpack.c.b16 %v484, %v483
    %v550 = vpack.c.b16 %v486, %v485
    %615 = vmatprep.subr.bf16.mxu0 0
    %616 = vmatpush1.bf16.msra.mxu0 %v494
    %617 = vmatprep.subr.bf16.mxu0 0
    %618 = vmatpush1.bf16.msra.mxu0 %v493
    %619 = vmatprep.subr.bf16.mxu0 0
    %620 = vmatpush1.bf16.msra.mxu0 %v492
    %621 = vmatprep.subr.bf16.mxu0 0
    %622 = vmatpush1.bf16.msra.mxu0 %v491
    %623 = vmatprep.subr.bf16.mxu0 0
    %624 = vmatpush1.bf16.msra.mxu0 %v490
    %625 = vmatprep.subr.bf16.mxu0 0
    %626 = vmatpush1.bf16.msra.mxu0 %v489
    %627 = vmatprep.subr.bf16.mxu0 0
    %628 = vmatpush1.bf16.msra.mxu0 %v488
    %629 = vmatprep.subr.bf16.mxu0 0
    %630 = vmatpush1.bf16.msra.mxu0 %v487
    %631 = vmatprep.subr.bf16.mxu0 0
    %632 = vmatpush2.bf16.msra.mxu0 %v502
    %633 = vmatprep.subr.bf16.mxu0 0
    %634 = vmatpush2.bf16.msra.mxu0 %v501
    %635 = vmatprep.subr.bf16.mxu0 0
    %636 = vmatpush2.bf16.msra.mxu0 %v500
    %637 = vmatprep.subr.bf16.mxu0 0
    %638 = vmatpush2.bf16.msra.mxu0 %v499
    %639 = vmatprep.subr.bf16.mxu0 0
    %640 = vmatpush2.bf16.msra.mxu0 %v498
    %641 = vmatprep.subr.bf16.mxu0 0
    %642 = vmatpush2.bf16.msra.mxu0 %v497
    %643 = vmatprep.subr.bf16.mxu0 0
    %644 = vmatpush2.bf16.msra.mxu0 %v496
    %645 = vmatprep.subr.bf16.mxu0 0
    %646 = vmatpush2.bf16.msra.mxu0 %v495
    %647 = vmatprep.mubr.bf16.mxu0 %v88
    %648 = vmatmul.mubr.bf16.gmra.mxu0 %v87
    %v649 = vpop.f32.mrf.mxu0
    %v650 = vadd.f32 0.0, %v649
    %v651 = vpop.f32.mrf.mxu0
    %v652 = vpop.f32.mrf.mxu0
    %v653 = vadd.f32 0.0, %v652
    %v654 = vpop.f32.mrf.mxu0
    %655 = vmatprep.mubr.bf16.mxu0 %v96
    %656 = vmatmul.mubr.bf16.gmra.mxu0 %v95
    %v657 = vpop.f32.mrf.mxu0
    %v658 = vadd.f32 0.0, %v657
    %v659 = vpop.f32.mrf.mxu0
    %v660 = vpop.f32.mrf.mxu0
    %v661 = vadd.f32 0.0, %v660
    %v662 = vpop.f32.mrf.mxu0
    %663 = vdwg.mxu0
    %664 = vmatprep.subr.bf16.mxu0 0
    %665 = vmatpush1.bf16.msra.mxu0 %v510
    %666 = vmatprep.subr.bf16.mxu0 0
    %667 = vmatpush1.bf16.msra.mxu0 %v509
    %668 = vmatprep.subr.bf16.mxu0 0
    %669 = vmatpush1.bf16.msra.mxu0 %v508
    %670 = vmatprep.subr.bf16.mxu0 0
    %671 = vmatpush1.bf16.msra.mxu0 %v507
    %672 = vmatprep.subr.bf16.mxu0 0
    %673 = vmatpush1.bf16.msra.mxu0 %v506
    %674 = vmatprep.subr.bf16.mxu0 0
    %675 = vmatpush1.bf16.msra.mxu0 %v505
    %676 = vmatprep.subr.bf16.mxu0 0
    %677 = vmatpush1.bf16.msra.mxu0 %v504
    %678 = vmatprep.subr.bf16.mxu0 0
    %679 = vmatpush1.bf16.msra.mxu0 %v503
    %680 = vmatprep.subr.bf16.mxu0 0
    %681 = vmatpush2.bf16.msra.mxu0 %v518
    %682 = vmatprep.subr.bf16.mxu0 0
    %683 = vmatpush2.bf16.msra.mxu0 %v517
    %684 = vmatprep.subr.bf16.mxu0 0
    %685 = vmatpush2.bf16.msra.mxu0 %v516
    %686 = vmatprep.subr.bf16.mxu0 0
    %687 = vmatpush2.bf16.msra.mxu0 %v515
    %688 = vmatprep.subr.bf16.mxu0 0
    %689 = vmatpush2.bf16.msra.mxu0 %v514
    %690 = vmatprep.subr.bf16.mxu0 0
    %691 = vmatpush2.bf16.msra.mxu0 %v513
    %692 = vmatprep.subr.bf16.mxu0 0
    %693 = vmatpush2.bf16.msra.mxu0 %v512
    %694 = vmatprep.subr.bf16.mxu0 0
    %695 = vmatpush2.bf16.msra.mxu0 %v511
    %696 = vmatprep.mubr.bf16.mxu0 %v90
    %697 = vmatmul.mubr.bf16.gmra.mxu0 %v89
    %v698 = vpop.f32.mrf.mxu0
    %v699 = vadd.f32 %v650, %v698
    %v700 = vpop.f32.mrf.mxu0
    %v701 = vpop.f32.mrf.mxu0
    %v702 = vadd.f32 %v653, %v701
    %v703 = vpop.f32.mrf.mxu0
    %704 = vmatprep.mubr.bf16.mxu0 %v98
    %705 = vmatmul.mubr.bf16.gmra.mxu0 %v97
    %v706 = vpop.f32.mrf.mxu0
    %v707 = vadd.f32 %v658, %v706
    %v708 = vpop.f32.mrf.mxu0
    %v709 = vpop.f32.mrf.mxu0
    %v710 = vadd.f32 %v661, %v709
    %v711 = vpop.f32.mrf.mxu0
    %712 = vdwg.mxu0
    %713 = vmatprep.subr.bf16.mxu0 0
    %714 = vmatpush1.bf16.msra.mxu0 %v526
    %715 = vmatprep.subr.bf16.mxu0 0
    %716 = vmatpush1.bf16.msra.mxu0 %v525
    %717 = vmatprep.subr.bf16.mxu0 0
    %718 = vmatpush1.bf16.msra.mxu0 %v524
    %719 = vmatprep.subr.bf16.mxu0 0
    %720 = vmatpush1.bf16.msra.mxu0 %v523
    %721 = vmatprep.subr.bf16.mxu0 0
    %722 = vmatpush1.bf16.msra.mxu0 %v522
    %723 = vmatprep.subr.bf16.mxu0 0
    %724 = vmatpush1.bf16.msra.mxu0 %v521
    %725 = vmatprep.subr.bf16.mxu0 0
    %726 = vmatpush1.bf16.msra.mxu0 %v520
    %727 = vmatprep.subr.bf16.mxu0 0
    %728 = vmatpush1.bf16.msra.mxu0 %v519
    %729 = vmatprep.subr.bf16.mxu0 0
    %730 = vmatpush2.bf16.msra.mxu0 %v534
    %731 = vmatprep.subr.bf16.mxu0 0
    %732 = vmatpush2.bf16.msra.mxu0 %v533
    %733 = vmatprep.subr.bf16.mxu0 0
    %734 = vmatpush2.bf16.msra.mxu0 %v532
    %735 = vmatprep.subr.bf16.mxu0 0
    %736 = vmatpush2.bf16.msra.mxu0 %v531
    %737 = vmatprep.subr.bf16.mxu0 0
    %738 = vmatpush2.bf16.msra.mxu0 %v530
    %739 = vmatprep.subr.bf16.mxu0 0
    %740 = vmatpush2.bf16.msra.mxu0 %v529
    %741 = vmatprep.subr.bf16.mxu0 0
    %742 = vmatpush2.bf16.msra.mxu0 %v528
    %743 = vmatprep.subr.bf16.mxu0 0
    %744 = vmatpush2.bf16.msra.mxu0 %v527
    %745 = vmatprep.mubr.bf16.mxu0 %v92
    %746 = vmatmul.mubr.bf16.gmra.mxu0 %v91
    %v747 = vpop.f32.mrf.mxu0
    %v748 = vadd.f32 %v699, %v747
    %v749 = vpop.f32.mrf.mxu0
    %v750 = vpop.f32.mrf.mxu0
    %v751 = vadd.f32 %v702, %v750
    %v752 = vpop.f32.mrf.mxu0
    %753 = vmatprep.mubr.bf16.mxu0 %v100
    %754 = vmatmul.mubr.bf16.gmra.mxu0 %v99
    %v755 = vpop.f32.mrf.mxu0
    %v756 = vadd.f32 %v707, %v755
    %v757 = vpop.f32.mrf.mxu0
    %v758 = vpop.f32.mrf.mxu0
    %v759 = vadd.f32 %v710, %v758
    %v760 = vpop.f32.mrf.mxu0
    %761 = vdwg.mxu0
    %762 = vmatprep.subr.bf16.mxu0 0
    %763 = vmatpush1.bf16.msra.mxu0 %v542
    %764 = vmatprep.subr.bf16.mxu0 0
    %765 = vmatpush1.bf16.msra.mxu0 %v541
    %766 = vmatprep.subr.bf16.mxu0 0
    %767 = vmatpush1.bf16.msra.mxu0 %v540
    %768 = vmatprep.subr.bf16.mxu0 0
    %769 = vmatpush1.bf16.msra.mxu0 %v539
    %770 = vmatprep.subr.bf16.mxu0 0
    %771 = vmatpush1.bf16.msra.mxu0 %v538
    %772 = vmatprep.subr.bf16.mxu0 0
    %773 = vmatpush1.bf16.msra.mxu0 %v537
    %774 = vmatprep.subr.bf16.mxu0 0
    %775 = vmatpush1.bf16.msra.mxu0 %v536
    %776 = vmatprep.subr.bf16.mxu0 0
    %777 = vmatpush1.bf16.msra.mxu0 %v535
    %778 = vmatprep.subr.bf16.mxu0 0
    %779 = vmatpush2.bf16.msra.mxu0 %v550
    %780 = vmatprep.subr.bf16.mxu0 0
    %781 = vmatpush2.bf16.msra.mxu0 %v549
    %782 = vmatprep.subr.bf16.mxu0 0
    %783 = vmatpush2.bf16.msra.mxu0 %v548
    %784 = vmatprep.subr.bf16.mxu0 0
    %785 = vmatpush2.bf16.msra.mxu0 %v547
    %786 = vmatprep.subr.bf16.mxu0 0
    %787 = vmatpush2.bf16.msra.mxu0 %v546
    %788 = vmatprep.subr.bf16.mxu0 0
    %789 = vmatpush2.bf16.msra.mxu0 %v545
    %790 = vmatprep.subr.bf16.mxu0 0
    %791 = vmatpush2.bf16.msra.mxu0 %v544
    %792 = vmatprep.subr.bf16.mxu0 0
    %793 = vmatpush2.bf16.msra.mxu0 %v543
    %794 = vmatprep.mubr.bf16.mxu0 %v94
    %795 = vmatmul.mubr.bf16.gmra.mxu0 %v93
    %v796 = vpop.f32.mrf.mxu0
    %v797 = vadd.f32 %v748, %v796
    %v798 = vpop.f32.mrf.mxu0
    %v799 = vpop.f32.mrf.mxu0
    %v800 = vadd.f32 %v751, %v799
    %v801 = vpop.f32.mrf.mxu0
    %802 = vmatprep.mubr.bf16.mxu0 %v102
    %803 = vmatmul.mubr.bf16.gmra.mxu0 %v101
    %v804 = vpop.f32.mrf.mxu0
    %v805 = vadd.f32 %v756, %v804
    %v806 = vpop.f32.mrf.mxu0
    %v807 = vpop.f32.mrf.mxu0
    %v808 = vadd.f32 %v759, %v807
    %v809 = vpop.f32.mrf.mxu0
    %810 = vdwg.mxu0
    %v811 = vadd.f32 %v51, %v797
    %v812 = vadd.f32 %v52, %v800
    %v813 = vadd.f32 %v53, %v805
    %v814 = vadd.f32 %v54, %v808
    %815 = vst [vmem:[#allocation2] sm:$0xff] %v811
    %816 = vst [vmem:[#allocation2 + $0x8] sm:$0xff] %v812
    %817 = vst [vmem:[#allocation2 + $0x10] sm:$0xff] %v813
    %818 = vst [vmem:[#allocation2 + $0x18] sm:$0xff] %v814
    // Predicated region
    $region26: #{_tied_ae_forward.2} parent=1 // pred_check
      %p819 = pneg %p43
    $region27: #{_tied_ae_forward.2} parent=1 // pred_check_branch
      %821 = sbr.rel (%p819) target = $region29
    $region28: #{_tied_ae_forward.2} parent=1 // pred_region
      %v822 = vld [vmem:[#allocation2] sm:$0xff]
      %v823 = vld [vmem:[#allocation2 + $0x8] sm:$0xff]
      %v824 = vld [vmem:[#allocation2 + $0x10] sm:$0xff]
      %v825 = vld [vmem:[#allocation2 + $0x18] sm:$0xff]
      %v826 = vld [vmem:[%s2] sm:$0x1]
      %v828 = vlaneseq
      %v829 = vshrl.u32 %v828, 7
      %v830 = vsub.s32 0, %v829
      %v831 = vrot.slane %v826, %v830
      %v833 = vadd.f32 %v822, %v831
      %v834 = vadd.f32 %v823, %v831
      %v835 = vadd.f32 %v824, %v831
      %v836 = vadd.f32 %v825, %v831
      %v837 = vpack.c.bf16 %v834, %v833
      %v838 = vpack.c.bf16 %v836, %v835
      %v841 = vunpack.c.l.b16 %v837
      %v842 = vunpack.c.h.b16 %v837
      %v843 = vunpack.c.l.b16 %v838
      %v844 = vunpack.c.h.b16 %v838
      %v845 = vpack.c.b16 %v841, %v841
      %v846 = vpack.c.b16 %v842, %v842
      %v847 = vpack.c.b16 %v843, %v843
      %v848 = vpack.c.b16 %v844, %v844
      %853 = vst [vmem:[%s3] sm:$0xf] %v845
      %854 = vst [vmem:[%s3 + $0x4] sm:$0xf] %v846
      %855 = vst [vmem:[%s3 + $0x8] sm:$0xf] %v847
      %856 = vst [vmem:[%s3 + $0xc] sm:$0xf] %v848
    $region29: #{_tied_ae_forward.2} parent=1 // pred_fallthru
      _
    // Predicated region
    $region30: #{_tied_ae_forward.2} parent=1 // pred_check
      _
    $region31: #{_tied_ae_forward.2} parent=1 // pred_check_branch
      %858 = sbr.rel (0) target = $region33
    $region32: #{_tied_ae_forward.2} parent=1 // pred_region
      _
    $region33: #{_tied_ae_forward.2} parent=1 // pred_fallthru
      _
    // Predicated region
    $region34: #{_tied_ae_forward.2} parent=1 // pred_check
      _
    $region35: #{_tied_ae_forward.2} parent=1 // pred_check_branch
      %860 = sbr.rel (0) target = $region37
    $region36: #{_tied_ae_forward.2} parent=1 // pred_region
      _
    $region37: #{_tied_ae_forward.2} parent=1 // pred_fallthru
      _
    %861 = vsyncpa [#allocation4], 1
    %862 = vsyncpa [#allocation6], 1

</llo_original>
